<compile_context>
chip_gen: v5e
topology: v5e:2x2
jax: 0.10.0
libtpu: 0.0.40
codegen_flags: <defaults>
</compile_context>

<pallas_src>
import functools

import jax
import jax.numpy as jnp
from jax.experimental import pallas as pl
from jax.experimental.pallas import tpu as pltpu


# ------------------------------- kernels ----------------------------------- #

def _qk_scores(q, k, mxu_dtype):
    """Q @ K^T on the MXU without materializing K^T (contract the last dims)."""
    return jax.lax.dot_general(
        q.astype(mxu_dtype), k.astype(mxu_dtype),
        (((1,), (1,)), ((), ())),
        preferred_element_type=jnp.float32)


def sdpa_single_step_kernel(q_ref, k_ref, v_ref, o_ref, *, scale, mxu_dtype):
    """One (batch, q-tile) program; whole K/V resident in VMEM -> exact softmax.

    q_ref: [TQ, D], k_ref: [Lk, D], v_ref: [Lk, Dv], o_ref: [TQ, Dv]
    """
    q = q_ref[...]
    if scale != 1.0:                      # static: scale folded into Q (O(TQ*D))
        q = q * scale
    s = _qk_scores(q, k_ref[...], mxu_dtype)                     # [TQ, Lk] f32
    m = jnp.max(s, axis=-1, keepdims=True)
    p = jnp.exp(s - m)
    l = jnp.sum(p, axis=-1, keepdims=True)
    ctx = jnp.dot(p.astype(mxu_dtype), v_ref[...].astype(mxu_dtype),
                  preferred_element_type=jnp.float32)            # [TQ, Dv] f32
    o_ref[...] = (ctx / l).astype(o_ref.dtype)                   # exact normalize


def sdpa_flash_kernel(q_ref, k_ref, v_ref, o_ref,
                      q_sc, m_sc, l_sc, acc_sc, *, scale, mxu_dtype):
    """Online-softmax step over one kv tile.

    q_ref: [TQ, D], k_ref: [TK, D], v_ref: [TK, Dv], o_ref: [TQ, Dv]
    q_sc:  [TQ, D] mxu_dtype (pre-scaled / pre-cast Q, written once per q tile)
    m_sc / l_sc: [TQ, 1] f32 running max / denom; acc_sc: [TQ, Dv] f32.
    """
    kv = pl.program_id(2)

    @pl.when(kv == 0)
    def _():
        q = q_ref[...]
        if scale != 1.0:
            q = q * scale
        q_sc[...] = q.astype(q_sc.dtype)        # hoist scale + cast out of kv loop
        m_sc[...] = jnp.full(m_sc.shape, -jnp.inf, m_sc.dtype)
        l_sc[...] = jnp.zeros(l_sc.shape, l_sc.dtype)
        acc_sc[...] = jnp.zeros(acc_sc.shape, acc_sc.dtype)

    s = _qk_scores(q_sc[...], k_ref[...], mxu_dtype)             # [TQ, TK] f32

    m_prev = m_sc[...]
    m_new = jnp.maximum(m_prev, jnp.max(s, axis=-1, keepdims=True))
    alpha = jnp.exp(m_prev - m_new)
    p = jnp.exp(s - m_new)
    l_sc[...] = alpha * l_sc[...] + jnp.sum(p, axis=-1, keepdims=True)
    acc_sc[...] = alpha * acc_sc[...] + jnp.dot(
        p.astype(mxu_dtype), v_ref[...].astype(mxu_dtype),
        preferred_element_type=jnp.float32)
    m_sc[...] = m_new

    @pl.when(kv == pl.num_programs(2) - 1)
    def _():
        o_ref[...] = (acc_sc[...] / l_sc[...]).astype(o_ref.dtype)   # exact divide


# ------------------------------- wrapper ------------------------------------ #

def _pick_tile(n, target):
    """Largest tile <= target that evenly divides n (falls back to full extent)."""
    if n <= target:
        return n
    t = target
    while t >= 8:
        if n % t == 0:
            return t
        t //= 2
    return n


def _vmem_estimate(TQ, TK, Dq, Dv, in_bytes, out_bytes, mxu_bytes, flash):
    """Rough per-program VMEM working set: double-buffered pipeline tiles +
    f32 score/prob temporaries + scratch."""
    tiles = 2 * (TQ * Dq * in_bytes        # Q
                 + TK * Dq * in_bytes      # K
                 + TK * Dv * in_bytes      # V
                 + TQ * Dv * out_bytes)    # out
    temps = 2 * TQ * TK * 4                # s and p (f32)
    scratch = 0
    if flash:
        scratch = TQ * Dq * mxu_bytes + 2 * TQ * 4 + TQ * Dv * 4
    return tiles + temps + scratch


def scaled_dot_product_attention(q, k, v, scale=None, *,
                                 tq=256, tk=512,
                                 mxu_dtype=jnp.bfloat16,
                                 vmem_budget_bytes=16 * 2 ** 20):
    """q: [B, Lq, D], k: [B, Lk, D], v: [B, Lk, Dv] -> context [B, Lq, Dv]."""
    B, Lq, Dq = q.shape
    Bk, Lk, Dk = k.shape
    Bv, Lv, Dv = v.shape
    assert B == Bk == Bv and Dq == Dk and Lk == Lv

    # Matches PyTorch `if scale:` (None / 0 -> no scaling); applied to Q in-kernel.
    scale_val = float(scale) if scale else 1.0

    in_bytes = jnp.dtype(q.dtype).itemsize
    out_bytes = in_bytes
    mxu_bytes = jnp.dtype(mxu_dtype).itemsize

    # Q tiling: big tiles, but keep >= 2 "parallel" programs so both v7x
    # TensorCores (sharded over the parallel grid axes) get work.
    TQ = _pick_tile(Lq, tq)
    while B * (Lq // TQ) < 2 and TQ % 2 == 0 and TQ > 8:
        TQ //= 2

    # KV tiling: collapse the kv axis when it fits the VMEM budget, otherwise
    # flash-tile it.  Budget is derived from the actual tile sizes so the choice
    # stays valid on v7x (64 MiB physical / 32 MiB scoped default VMEM).
    TK = _pick_tile(Lk, tk)
    while (_vmem_estimate(TQ, TK, Dq, Dv, in_bytes, out_bytes, mxu_bytes,
                          flash=(TK != Lk)) > vmem_budget_bytes
           and TK % 2 == 0 and TK > 128):
        TK //= 2
    single_step = (TK == Lk)

    est = _vmem_estimate(TQ, TK, Dq, Dv, in_bytes, out_bytes, mxu_bytes,
                         flash=not single_step)
    vmem_limit = int(min(max(2 * est + (4 << 20), 16 << 20), 48 << 20))

    if single_step:
        grid = (B, Lq // TQ)
        kernel = functools.partial(sdpa_single_step_kernel,
                                   scale=scale_val, mxu_dtype=mxu_dtype)
        in_specs = [
            pl.BlockSpec((None, TQ, Dq), lambda b, qi: (b, qi, 0)),
            pl.BlockSpec((None, Lk, Dk), lambda b, qi: (b, 0, 0)),
            pl.BlockSpec((None, Lk, Dv), lambda b, qi: (b, 0, 0)),
        ]
        out_spec = pl.BlockSpec((None, TQ, Dv), lambda b, qi: (b, qi, 0))
        scratch_shapes = ()
        dim_sem = ("parallel", "parallel")
    else:
        grid = (B, Lq // TQ, Lk // TK)
        kernel = functools.partial(sdpa_flash_kernel,
                                   scale=scale_val, mxu_dtype=mxu_dtype)
        in_specs = [
            pl.BlockSpec((None, TQ, Dq), lambda b, qi, ki: (b, qi, 0)),
            pl.BlockSpec((None, TK, Dk), lambda b, qi, ki: (b, ki, 0)),
            pl.BlockSpec((None, TK, Dv), lambda b, qi, ki: (b, ki, 0)),
        ]
        out_spec = pl.BlockSpec((None, TQ, Dv), lambda b, qi, ki: (b, qi, 0))
        scratch_shapes = (
            pltpu.VMEM((TQ, Dq), mxu_dtype),    # pre-scaled / pre-cast Q
            pltpu.VMEM((TQ, 1), jnp.float32),   # running row max  m
            pltpu.VMEM((TQ, 1), jnp.float32),   # running denom    l
            pltpu.VMEM((TQ, Dv), jnp.float32),  # output accumulator
        )
        dim_sem = ("parallel", "parallel", "arbitrary")

    return pl.pallas_call(
        kernel,
        grid=grid,
        in_specs=in_specs,
        out_specs=out_spec,
        out_shape=jax.ShapeDtypeStruct((B, Lq, Dv), q.dtype),
        scratch_shapes=scratch_shapes,
        compiler_params=pltpu.CompilerParams(
            dimension_semantics=dim_sem,
            vmem_limit_bytes=vmem_limit),
    )(q, k, v)


# --------------------------- pure-JAX reference ----------------------------- #

def reference(q, k, v, scale=None):
    att = jnp.einsum("bqd,bkd->bqk", q, k)
    if scale:
        att = att * scale
    att = jax.nn.softmax(att, axis=-1)
    return jnp.einsum("bqk,bkd->bqd", att, v)


# ----------------------------------- main ------------------------------------ #

if __name__ == "__main__":
    # batch=2, len_Q=len_K=len_V=256, dim=dim_V=128 (lane-dense last dims).
    B, Lq, Lk, D, Dv = 2, 256, 256, 128, 128

    key = jax.random.PRNGKey(0)
    kq, kk, kv_ = jax.random.split(key, 3)
    Q = jax.random.normal(kq, (B, Lq, D), jnp.float32)
    K = jax.random.normal(kk, (B, Lk, D), jnp.float32)
    V = jax.random.normal(kv_, (B, Lk, Dv), jnp.float32)
    scale = 1.0 / float(D) ** 0.5

    ref_scaled = reference(Q, K, V, scale)
    ref_noscale = reference(Q, K, V, None)

    # 1) Default fast path: bf16 MXU feed, single kv step (TK == Lk), TQ = 256.
    out = jax.block_until_ready(scaled_dot_product_attention(Q, K, V, scale))
    assert out.shape == (B, Lq, Dv)
    assert jnp.allclose(out, ref_scaled, rtol=1e-2, atol=1e-2), \
        "mismatch (bf16 MXU, single kv step)"

    # 2) f32 MXU path: bit-close parity with the f32 PyTorch module numerics.
    out_f32 = jax.block_until_ready(
        scaled_dot_product_attention(Q, K, V, scale, mxu_dtype=jnp.float32))
    assert jnp.allclose(out_f32, ref_scaled, rtol=2e-3, atol=2e-3), \
        "mismatch (f32 MXU, scaled)"

    out_f32_ns = jax.block_until_ready(
        scaled_dot_product_attention(Q, K, V, None, mxu_dtype=jnp.float32))
    assert jnp.allclose(out_f32_ns, ref_noscale, rtol=2e-3, atol=2e-3), \
        "mismatch (f32 MXU, no scale)"

    # 3) Multi-kv-step flash path (forced with small tiles), f32, no scale:
    #    the exact configuration that regressed previously.
    out_flash = jax.block_until_ready(
        scaled_dot_product_attention(Q, K, V, None, tq=128, tk=128,
                                     mxu_dtype=jnp.float32))
    assert jnp.allclose(out_flash, ref_noscale, rtol=2e-3, atol=2e-3), \
        "mismatch (f32 flash path, no scale)"

    # 4) Flash path with the default bf16 MXU feed, scaled.
    out_flash_bf16 = jax.block_until_ready(
        scaled_dot_product_attention(Q, K, V, scale, tq=128, tk=128))
    assert jnp.allclose(out_flash_bf16, ref_scaled, rtol=1e-2, atol=1e-2), \
        "mismatch (bf16 flash path, scaled)"

    print("KERNEL_OK")
</pallas_src>

<mosaic_0001>
module attributes {stable_mosaic.version = 11 : i64} {
  func.func @sdpa_single_step_kernel(%arg0: i32, %arg1: i32, %arg2: memref<1x256x128xf32, #tpu.memory_space<vmem>>, %arg3: memref<1x256x128xf32, #tpu.memory_space<vmem>>, %arg4: memref<1x256x128xf32, #tpu.memory_space<vmem>>, %arg5: memref<1x256x128xf32, #tpu.memory_space<vmem>>) attributes {dimension_semantics = [#tpu.dimension_semantics<parallel>, #tpu.dimension_semantics<parallel>], iteration_bounds = array<i64: 2, 1>, scalar_prefetch = 0 : i64, scratch_operands = 0 : i64, tpu.core_type = #tpu.core_type<tc>, window_params = [{transform_indices = @transform_0, window_bounds = array<i64: 1, 256, 128>}, {transform_indices = @transform_1, window_bounds = array<i64: 1, 256, 128>}, {transform_indices = @transform_2, window_bounds = array<i64: 1, 256, 128>}, {transform_indices = @transform_3, window_bounds = array<i64: 1, 256, 128>}]} {
    %c0 = arith.constant 0 : index
    %c0_0 = arith.constant 0 : index
    %c0_1 = arith.constant 0 : index
    %0 = vector.load %arg2[%c0, %c0_0, %c0_1] : memref<1x256x128xf32, #tpu.memory_space<vmem>>, vector<1x256x128xf32>
    %1 = vector.shape_cast %0 : vector<1x256x128xf32> to vector<256x128xf32>
    %cst = arith.constant 0.0883883461 : f32
    %2 = vector.broadcast %cst : f32 to vector<256x128xf32>
    %3 = arith.mulf %1, %2 : vector<256x128xf32>
    %c0_2 = arith.constant 0 : index
    %c0_3 = arith.constant 0 : index
    %c0_4 = arith.constant 0 : index
    %4 = vector.load %arg3[%c0_2, %c0_3, %c0_4] : memref<1x256x128xf32, #tpu.memory_space<vmem>>, vector<1x256x128xf32>
    %5 = vector.shape_cast %4 : vector<1x256x128xf32> to vector<256x128xf32>
    %6 = arith.truncf %3 : vector<256x128xf32> to vector<256x128xbf16>
    %7 = arith.truncf %5 : vector<256x128xf32> to vector<256x128xbf16>
    %cst_5 = arith.constant dense<0.000000e+00> : vector<256x256xf32>
    %8 = tpu.matmul %6, %7, %cst_5 {dimension_numbers = #tpu.dot_dimension_numbers<[1], [1], [0], [0], [0, 0, 1, 0], [], []>} : vector<256x128xbf16>, vector<256x128xbf16>, vector<256x256xf32> -> vector<256x256xf32>
    %cst_6 = arith.constant dense<0xFF800000> : vector<256xf32>
    %9 = vector.multi_reduction <maximumf>, %8, %cst_6 [1] : vector<256x256xf32> to vector<256xf32>
    %10 = vector.shape_cast %9 : vector<256xf32> to vector<256x1xf32>
    %11 = vector.broadcast %10 : vector<256x1xf32> to vector<256x256xf32>
    %12 = arith.subf %8, %11 : vector<256x256xf32>
    %13 = math.exp %12 : vector<256x256xf32>
    %cst_7 = arith.constant dense<0.000000e+00> : vector<256xf32>
    %14 = vector.multi_reduction <add>, %13, %cst_7 [1] : vector<256x256xf32> to vector<256xf32>
    %15 = vector.shape_cast %14 : vector<256xf32> to vector<256x1xf32>
    %16 = arith.truncf %13 : vector<256x256xf32> to vector<256x256xbf16>
    %c0_8 = arith.constant 0 : index
    %c0_9 = arith.constant 0 : index
    %c0_10 = arith.constant 0 : index
    %17 = vector.load %arg4[%c0_8, %c0_9, %c0_10] : memref<1x256x128xf32, #tpu.memory_space<vmem>>, vector<1x256x128xf32>
    %18 = vector.shape_cast %17 : vector<1x256x128xf32> to vector<256x128xf32>
    %19 = arith.truncf %18 : vector<256x128xf32> to vector<256x128xbf16>
    %cst_11 = arith.constant dense<0.000000e+00> : vector<256x128xf32>
    %20 = tpu.matmul %16, %19, %cst_11 {dimension_numbers = #tpu.dot_dimension_numbers<[1], [0], [0], [1], [0, 0, 1, 1], [], []>} : vector<256x256xbf16>, vector<256x128xbf16>, vector<256x128xf32> -> vector<256x128xf32>
    %21 = vector.broadcast %15 : vector<256x1xf32> to vector<256x128xf32>
    %22 = arith.divf %20, %21 : vector<256x128xf32>
    %c0_12 = arith.constant 0 : index
    %c0_13 = arith.constant 0 : index
    %c0_14 = arith.constant 0 : index
    %23 = vector.load %arg5[%c0_12, %c0_13, %c0_14] : memref<1x256x128xf32, #tpu.memory_space<vmem>>, vector<1x256x128xf32>
    %24 = vector.shape_cast %23 : vector<1x256x128xf32> to vector<256x128xf32>
    %25 = vector.shape_cast %22 : vector<256x128xf32> to vector<1x256x128xf32>
    tpu.vector_store %arg5[%c0_12, %c0_13, %c0_14], %25 {strides = array<i32>} : memref<1x256x128xf32, #tpu.memory_space<vmem>>, vector<1x256x128xf32>,
    return
  }
  func.func @transform_0(%arg0: i32, %arg1: i32) -> (i32, i32, i32) {
    %c0_i32 = arith.constant 0 : i32
    %c0_i32_0 = arith.constant 0 : i32
    return %arg0, %arg1, %c0_i32 : i32, i32, i32
  }
  func.func @transform_1(%arg0: i32, %arg1: i32) -> (i32, i32, i32) {
    %c0_i32 = arith.constant 0 : i32
    %c0_i32_0 = arith.constant 0 : i32
    %c0_i32_1 = arith.constant 0 : i32
    return %arg0, %c0_i32, %c0_i32_0 : i32, i32, i32
  }
  func.func @transform_2(%arg0: i32, %arg1: i32) -> (i32, i32, i32) {
    %c0_i32 = arith.constant 0 : i32
    %c0_i32_0 = arith.constant 0 : i32
    %c0_i32_1 = arith.constant 0 : i32
    return %arg0, %c0_i32, %c0_i32_0 : i32, i32, i32
  }
  func.func @transform_3(%arg0: i32, %arg1: i32) -> (i32, i32, i32) {
    %c0_i32 = arith.constant 0 : i32
    %c0_i32_0 = arith.constant 0 : i32
    return %arg0, %arg1, %c0_i32 : i32, i32, i32
  }
}

</mosaic_0001>

<llo_original>
// kernel: tpu_custom_call.1
$region0: #{tpu_custom_call.1}
  #allocation0 [shape = 'u32[]', space=smem, size = 0x4, offset = 0x4, fixed_abs, tag = 'smem constant byte address 0x4 - core index']
  #allocation1 [shape = 'u32[72,128]{1,0:T(1,128)}', space=vmem, size = 0x9000, scoped, tag = 'internal scratch']
  %s0 = inlined_call_operand.hbm [shape: f32[2,256,128], index: 0, kind: input, shape index: {}]
  %s1 = inlined_call_operand.hbm [shape: f32[2,256,128], index: 1, kind: input, shape index: {}]
  %s2 = inlined_call_operand.hbm [shape: f32[2,256,128], index: 2, kind: input, shape index: {}]
  %s3 = inlined_call_operand.hbm [shape: f32[2,256,128], index: 3, kind: output, shape index: {}]
  %s4 = sld [smem:[#allocation0]]
  $region57: #{tpu_custom_call.1} parent=0
    _
  %s6 = ssub.s32 1, %s4
  %s7 = scalar_select 0, %s6, %s4
  $region1: #{tpu_custom_call.1} parent=0
    #allocation2 [shape = 'u8[262144]{0}', space=vmem, size = 0x40000, scoped, tag = 'input window, operand 0']
    #allocation3 [shape = 's32[2]{0}', space=sflag, size = 0x8, scoped, tag = 'scoped memory for tpu_custom_call.1']
    #allocation4 [shape = 's32[2]{0}', space=sflag, size = 0x8, scoped, tag = 'scoped memory for tpu_custom_call.1']
    #allocation5 [shape = 'u8[262144]{0}', space=vmem, size = 0x40000, scoped, tag = 'input window, operand 1']
    #allocation6 [shape = 's32[2]{0}', space=sflag, size = 0x8, scoped, tag = 'scoped memory for tpu_custom_call.1']
    #allocation7 [shape = 'u8[262144]{0}', space=vmem, size = 0x40000, scoped, tag = 'input window, operand 2']
    #allocation8 [shape = 'u8[262144]{0}', space=vmem, size = 0x40000, scoped, tag = 'output window, operand 0']
    %8 = vsyncpa [#allocation3], 0
    %s9 = scalar_lea.sflag [#allocation3], 1
    %10 = vsyncpa %s9, 0
    %11 = vsyncpa [#allocation6], 0
    %s12 = scalar_lea.sflag [#allocation6], 1
    %13 = vsyncpa %s12, 0
    %14 = vsyncpa [#allocation4], 0
    %s15 = scalar_lea.sflag [#allocation4], 1
    %16 = vsyncpa %s15, 0
    loop: start=0, step=1, limit=4
    $region2: #{tpu_custom_call.1} parent=1 // loop_pre_header
      _
    $region3: #{tpu_custom_call.1} parent=1 // loop_header
      %s18 = sphi 0, %s22
      %p19 = scmp.ge.s32.totalorder %s18, 4
      %s25 = sphi 0, %s37
      %s26 = sphi 0, %s33
      %s27 = sphi 0, %s25
      %s28 = sphi 0, %s26
      %s29 = sphi 0, %s27
      %s30 = sphi 0, %s28
      %s42 = sphi 0, %s44
      %s45 = sphi 0, %s42
      %s46 = sphi 0, %s45
      %s62 = sphi 0, %s46
      %s68 = sphi 0, %s70
      %s71 = sphi 0, %s68
      %s72 = sphi 0, %s71
      %s88 = sphi 0, %s72
      %s94 = sphi 0, %s96
      %s97 = sphi 0, %s94
      %s98 = sphi 0, %s97
      %s114 = sphi 0, %s98
      %s122 = sphi 0, %s124
      %s125 = sphi 0, %s122
      %s126 = sphi 0, %s125
      %s142 = sphi 0, %s126
    $region4: #{tpu_custom_call.1} parent=1 // loop_header_branch
      %21 = sbr.rel (%p19) target = $region8
    $region5: #{tpu_custom_call.1} parent=1 // loop_body
      %s23 = ssub.s32 %s18, 1
      %s24 = ssub.s32 %s18, 2
      %s31 = sadd.s32 1, %s26
      %p32 = scmp.ge.s32.totalorder %s31, 1
      %s33 = scalar_select %p32, 0, %s31
      %s34 = sadd.s32 1, %s25
      %s35 = scalar_select %p32, %s34, %s25
      %p36 = scmp.ge.s32.totalorder %s35, 2
      %s37 = scalar_select %p36, 0, %s35
      %s38 = ssub.s32 %s25, %s37
      %s39 = ssub.s32 %s26, %s33
      %s40 = sor.u32 %s38, %s39
      %p41 = scmp.eq.s32.totalorder %s40, 0
      %s43 = sadd.s32 %s42, 1
      %s44 = scalar_select %p41, %s42, %s43
      %p47 = pneg %p41
      %p48 = scmp.eq.s32.totalorder %s18, 1
      %p49 = por %p47, %p48
      %p50 = scmp.ne.s32.totalorder %s42, %s45
      %p51 = scmp.eq.s32.totalorder %s18, 0
      %p52 = por %p50, %p51
      %p53 = scmp.ne.s32.totalorder %s42, %s45
      %p54 = scmp.eq.s32.totalorder %s23, 1
      %p55 = por %p53, %p54
      %p56 = scmp.ne.s32.totalorder %s45, %s46
      %p57 = scmp.eq.s32.totalorder %s23, 0
      %p58 = por %p56, %p57
      %p59 = scmp.ne.s32.totalorder %s45, %s46
      %p60 = scmp.eq.s32.totalorder %s24, 1
      %p61 = por %p59, %p60
      %p63 = scmp.ne.s32.totalorder %s46, %s62
      %p64 = scmp.eq.s32.totalorder %s24, 0
      %p65 = por %p63, %p64
      %s66 = ssub.s32 %s25, %s37
      %p67 = scmp.eq.s32.totalorder %s66, 0
      %s69 = sadd.s32 %s68, 1
      %s70 = scalar_select %p67, %s68, %s69
      %p73 = pneg %p67
      %p74 = scmp.eq.s32.totalorder %s18, 1
      %p75 = por %p73, %p74
      %p76 = scmp.ne.s32.totalorder %s68, %s71
      %p77 = scmp.eq.s32.totalorder %s18, 0
      %p78 = por %p76, %p77
      %p79 = scmp.ne.s32.totalorder %s68, %s71
      %p80 = scmp.eq.s32.totalorder %s23, 1
      %p81 = por %p79, %p80
      %p82 = scmp.ne.s32.totalorder %s71, %s72
      %p83 = scmp.eq.s32.totalorder %s23, 0
      %p84 = por %p82, %p83
      %p85 = scmp.ne.s32.totalorder %s71, %s72
      %p86 = scmp.eq.s32.totalorder %s24, 1
      %p87 = por %p85, %p86
      %p89 = scmp.ne.s32.totalorder %s72, %s88
      %p90 = scmp.eq.s32.totalorder %s24, 0
      %p91 = por %p89, %p90
      %s92 = ssub.s32 %s25, %s37
      %p93 = scmp.eq.s32.totalorder %s92, 0
      %s95 = sadd.s32 %s94, 1
      %s96 = scalar_select %p93, %s94, %s95
      %p99 = pneg %p93
      %p100 = scmp.eq.s32.totalorder %s18, 1
      %p101 = por %p99, %p100
      %p102 = scmp.ne.s32.totalorder %s94, %s97
      %p103 = scmp.eq.s32.totalorder %s18, 0
      %p104 = por %p102, %p103
      %p105 = scmp.ne.s32.totalorder %s94, %s97
      %p106 = scmp.eq.s32.totalorder %s23, 1
      %p107 = por %p105, %p106
      %p108 = scmp.ne.s32.totalorder %s97, %s98
      %p109 = scmp.eq.s32.totalorder %s23, 0
      %p110 = por %p108, %p109
      %p111 = scmp.ne.s32.totalorder %s97, %s98
      %p112 = scmp.eq.s32.totalorder %s24, 1
      %p113 = por %p111, %p112
      %p115 = scmp.ne.s32.totalorder %s98, %s114
      %p116 = scmp.eq.s32.totalorder %s24, 0
      %p117 = por %p115, %p116
      %s118 = ssub.s32 %s25, %s37
      %s119 = ssub.s32 %s26, %s33
      %s120 = sor.u32 %s118, %s119
      %p121 = scmp.eq.s32.totalorder %s120, 0
      %s123 = sadd.s32 %s122, 1
      %s124 = scalar_select %p121, %s122, %s123
      %p127 = pneg %p121
      %p128 = scmp.eq.s32.totalorder %s18, 1
      %p129 = por %p127, %p128
      %p130 = scmp.ne.s32.totalorder %s122, %s125
      %p131 = scmp.eq.s32.totalorder %s18, 0
      %p132 = por %p130, %p131
      %p133 = scmp.ne.s32.totalorder %s122, %s125
      %p134 = scmp.eq.s32.totalorder %s23, 1
      %p135 = por %p133, %p134
      %p136 = scmp.ne.s32.totalorder %s125, %s126
      %p137 = scmp.eq.s32.totalorder %s23, 0
      %p138 = por %p136, %p137
      %p139 = scmp.ne.s32.totalorder %s125, %s126
      %p140 = scmp.eq.s32.totalorder %s24, 1
      %p141 = por %p139, %p140
      %p143 = scmp.ne.s32.totalorder %s126, %s142
      %p144 = scmp.eq.s32.totalorder %s24, 0
      %p145 = por %p143, %p144
      %p146 = scmp.le.s32.totalorder 1, %s18
      %p147 = scmp.lt.s32.totalorder %s18, 3
      %p148 = pnand %p146, %p147
      %p149 = pneg %p148
      // Predicated region
      $region9: #{tpu_custom_call.1} parent=5 // pred_check
        _
      $region10: #{tpu_custom_call.1} parent=5 // pred_check_branch
        %151 = sbr.rel (%p148) target = $region12
      $region11: #{tpu_custom_call.1} parent=5 // pred_region
        %s152 = ssub.s32 %s18, 1
      $region12: #{tpu_custom_call.1} parent=5 // pred_fallthru
        _
      %p153 = scmp.lt.s32.totalorder %s18, 2
      // Predicated region
      $region13: #{tpu_custom_call.1} parent=5 // pred_check
        %p154 = pneg %p153
      $region14: #{tpu_custom_call.1} parent=5 // pred_check_branch
        %156 = sbr.rel (%p154) target = $region16
      $region15: #{tpu_custom_call.1} parent=5 // pred_region
        // Predicated region
        $region17: #{tpu_custom_call.1} parent=15 // pred_check
          %p157 = pneg %p52
        $region18: #{tpu_custom_call.1} parent=15 // pred_check_branch
          %159 = sbr.rel (%p157) target = $region20
        $region19: #{tpu_custom_call.1} parent=15 // pred_region
          %s160 = sand.u32 %s42, 1
          %s161 = scalar_lea.sflag [#allocation3], %s160
          %s162 = sand.u32 %s42, 1
          %s163 = smul.addr %s162, 256
          %s164 = scalar_lea.vmem [#allocation2], %s163
          %s165 = smul.u32 32, %s26
          %167 = vsyncadd %s161, 0
          %s168 = smul.addr %s25, 32
          %s169 = sadd.s32 %s165, %s168
          %s170 = smul.addr %s169, 8
          %s171 = scalar_lea.hbm %s0, %s170
          %s172 = sshll.u32 %s171, 4
          %s173 = int_to_ptr.hbm [resolvable:$true] %s172
          %s174 = sshll.u32 %s164, 4
          %s175 = int_to_ptr.vmem [resolvable:$true] %s174
          %180 = dma.hbm_to_vmem [thread:$0]  %s173, 4096, %s175, %s161, 128, 128, 8
        $region20: #{tpu_custom_call.1} parent=15 // pred_fallthru
          _
        // Predicated region
        $region21: #{tpu_custom_call.1} parent=15 // pred_check
          %p181 = pneg %p78
        $region22: #{tpu_custom_call.1} parent=15 // pred_check_branch
          %183 = sbr.rel (%p181) target = $region24
        $region23: #{tpu_custom_call.1} parent=15 // pred_region
          %s184 = sand.u32 %s18, 1
          %s185 = scalar_lea.sflag [#allocation6], %s184
          %s186 = sand.u32 %s68, 1
          %s187 = smul.addr %s186, 256
          %s188 = scalar_lea.vmem [#allocation5], %s187
          %190 = vsyncadd %s185, 0
          %s191 = smul.addr %s25, 32
          %s192 = smul.addr %s191, 8
          %s193 = scalar_lea.hbm %s1, %s192
          %s194 = sshll.u32 %s193, 4
          %s195 = int_to_ptr.hbm [resolvable:$true] %s194
          %s196 = sshll.u32 %s188, 4
          %s197 = int_to_ptr.vmem [resolvable:$true] %s196
          %202 = dma.hbm_to_vmem [thread:$0]  %s195, 4096, %s197, %s185, 128, 128, 8
        $region24: #{tpu_custom_call.1} parent=15 // pred_fallthru
          _
        // Predicated region
        $region25: #{tpu_custom_call.1} parent=15 // pred_check
          %p203 = pneg %p104
        $region26: #{tpu_custom_call.1} parent=15 // pred_check_branch
          %205 = sbr.rel (%p203) target = $region28
        $region27: #{tpu_custom_call.1} parent=15 // pred_region
          %s206 = sand.u32 %s18, 1
          %s207 = scalar_lea.sflag [#allocation6], %s206
          %s208 = sand.u32 %s94, 1
          %s209 = smul.addr %s208, 256
          %s210 = scalar_lea.vmem [#allocation7], %s209
          %212 = vsyncadd %s207, 0
          %s213 = smul.addr %s25, 32
          %s214 = smul.addr %s213, 8
          %s215 = scalar_lea.hbm %s2, %s214
          %s216 = sshll.u32 %s215, 4
          %s217 = int_to_ptr.hbm [resolvable:$true] %s216
          %s218 = sshll.u32 %s210, 4
          %s219 = int_to_ptr.vmem [resolvable:$true] %s218
          %224 = dma.hbm_to_vmem [thread:$0]  %s217, 4096, %s219, %s207, 128, 128, 8
        $region28: #{tpu_custom_call.1} parent=15 // pred_fallthru
          _
      $region16: #{tpu_custom_call.1} parent=5 // pred_fallthru
        _
      %p225 = scmp.le.s32.totalorder 1, %s18
      %p226 = scmp.lt.s32.totalorder %s18, 3
      %p227 = pnand %p225, %p226
      %p228 = pneg %p227
      // Predicated region
      $region29: #{tpu_custom_call.1} parent=5 // pred_check
        _
      $region30: #{tpu_custom_call.1} parent=5 // pred_check_branch
        %230 = sbr.rel (%p227) target = $region32
      $region31: #{tpu_custom_call.1} parent=5 // pred_region
        %s231 = ssub.s32 %s18, 1
        %s232 = sand.u32 %s45, 1
        %s233 = scalar_lea.sflag [#allocation3], %s232
        %s234 = sand.u32 %s45, 1
        %s235 = smul.addr %s234, 256
        %s236 = scalar_lea.vmem [#allocation2], %s235
        // Predicated region
        $region33: #{tpu_custom_call.1} parent=31 // pred_check
          %p237 = pneg %p58
        $region34: #{tpu_custom_call.1} parent=31 // pred_check_branch
          %239 = sbr.rel (%p237) target = $region36
        $region35: #{tpu_custom_call.1} parent=31 // pred_region
          %241 = dma.done %s233, 4096
        $region36: #{tpu_custom_call.1} parent=31 // pred_fallthru
          _
        %s242 = sand.u32 %s23, 1
        %s243 = scalar_lea.sflag [#allocation6], %s242
        %s244 = sand.u32 %s71, 1
        %s245 = smul.addr %s244, 256
        %s246 = scalar_lea.vmem [#allocation5], %s245
        // Predicated region
        $region37: #{tpu_custom_call.1} parent=31 // pred_check
          %p247 = pneg %p84
        $region38: #{tpu_custom_call.1} parent=31 // pred_check_branch
          %249 = sbr.rel (%p247) target = $region40
        $region39: #{tpu_custom_call.1} parent=31 // pred_region
          %251 = dma.done %s243, 4096
        $region40: #{tpu_custom_call.1} parent=31 // pred_fallthru
          _
        %s252 = sand.u32 %s23, 1
        %s253 = scalar_lea.sflag [#allocation6], %s252
        %s254 = sand.u32 %s97, 1
        %s255 = smul.addr %s254, 256
        %s256 = scalar_lea.vmem [#allocation7], %s255
        // Predicated region
        $region41: #{tpu_custom_call.1} parent=31 // pred_check
          %p257 = pneg %p110
        $region42: #{tpu_custom_call.1} parent=31 // pred_check_branch
          %259 = sbr.rel (%p257) target = $region44
        $region43: #{tpu_custom_call.1} parent=31 // pred_region
          %261 = dma.done %s253, 4096
        $region44: #{tpu_custom_call.1} parent=31 // pred_fallthru
          _
        %s262 = sand.u32 %s45, 1
        %s263 = scalar_lea.sflag [#allocation3], %s262
        %s264 = sand.u32 %s45, 1
        %s265 = smul.addr %s264, 256
        %s266 = scalar_lea.vmem [#allocation2], %s265
        %p267 = pneg %p58
        %p268 = pneg %p55
        %s269 = sand.u32 %s23, 1
        %s270 = scalar_lea.sflag [#allocation6], %s269
        %s271 = sand.u32 %s71, 1
        %s272 = smul.addr %s271, 256
        %s273 = scalar_lea.vmem [#allocation5], %s272
        %p274 = pneg %p84
        %p275 = pneg %p81
        %s276 = sand.u32 %s23, 1
        %s277 = scalar_lea.sflag [#allocation6], %s276
        %s278 = sand.u32 %s97, 1
        %s279 = smul.addr %s278, 256
        %s280 = scalar_lea.vmem [#allocation7], %s279
        %p281 = pneg %p110
        %p282 = pneg %p107
        %p283 = pneg %p138
        %p284 = pneg %p135
        %s285 = sand.u32 %s125, 1
        %s286 = scalar_lea.sflag [#allocation4], %s285
        %s287 = sand.u32 %s125, 1
        %s288 = smul.addr %s287, 256
        %s289 = scalar_lea.vmem [#allocation8], %s288
        %s290 = smul.u32 32, %s28
        %s291 = smul.u32 32, %s28
        %v292 = vld [vmem:[%s236] sm:$0xff]
        %v293 = vld [vmem:[%s236 + $0x8] sm:$0xff]
        %v294 = vld [vmem:[%s236 + $0x10] sm:$0xff]
        %v295 = vld [vmem:[%s236 + $0x18] sm:$0xff]
        %v296 = vld [vmem:[%s236 + $0x20] sm:$0xff]
        %v297 = vld [vmem:[%s236 + $0x28] sm:$0xff]
        %v298 = vld [vmem:[%s236 + $0x30] sm:$0xff]
        %v299 = vld [vmem:[%s236 + $0x38] sm:$0xff]
        %v300 = vld [vmem:[%s236 + $0x40] sm:$0xff]
        %v301 = vld [vmem:[%s236 + $0x48] sm:$0xff]
        %v302 = vld [vmem:[%s236 + $0x50] sm:$0xff]
        %v303 = vld [vmem:[%s236 + $0x58] sm:$0xff]
        %v304 = vld [vmem:[%s236 + $0x60] sm:$0xff]
        %v305 = vld [vmem:[%s236 + $0x68] sm:$0xff]
        %v306 = vld [vmem:[%s236 + $0x70] sm:$0xff]
        %v307 = vld [vmem:[%s236 + $0x78] sm:$0xff]
        %v308 = vld [vmem:[%s236 + $0x80] sm:$0xff]
        %v309 = vld [vmem:[%s236 + $0x88] sm:$0xff]
        %v310 = vld [vmem:[%s236 + $0x90] sm:$0xff]
        %v311 = vld [vmem:[%s236 + $0x98] sm:$0xff]
        %v312 = vld [vmem:[%s236 + $0xa0] sm:$0xff]
        %v313 = vld [vmem:[%s236 + $0xa8] sm:$0xff]
        %v314 = vld [vmem:[%s236 + $0xb0] sm:$0xff]
        %v315 = vld [vmem:[%s236 + $0xb8] sm:$0xff]
        %v316 = vld [vmem:[%s236 + $0xc0] sm:$0xff]
        %v317 = vld [vmem:[%s236 + $0xc8] sm:$0xff]
        %v318 = vld [vmem:[%s236 + $0xd0] sm:$0xff]
        %v319 = vld [vmem:[%s236 + $0xd8] sm:$0xff]
        %v320 = vld [vmem:[%s236 + $0xe0] sm:$0xff]
        %v321 = vld [vmem:[%s236 + $0xe8] sm:$0xff]
        %v322 = vld [vmem:[%s236 + $0xf0] sm:$0xff]
        %v323 = vld [vmem:[%s236 + $0xf8] sm:$0xff]
        %v324 = vmul.f32 %v292, 0.088388346
        %v325 = vmul.f32 %v293, 0.088388346
        %v326 = vmul.f32 %v294, 0.088388346
        %v327 = vmul.f32 %v295, 0.088388346
        %v328 = vmul.f32 %v296, 0.088388346
        %v329 = vmul.f32 %v297, 0.088388346
        %v330 = vmul.f32 %v298, 0.088388346
        %v331 = vmul.f32 %v299, 0.088388346
        %v332 = vmul.f32 %v300, 0.088388346
        %v333 = vmul.f32 %v301, 0.088388346
        %v334 = vmul.f32 %v302, 0.088388346
        %v335 = vmul.f32 %v303, 0.088388346
        %v336 = vmul.f32 %v304, 0.088388346
        %v337 = vmul.f32 %v305, 0.088388346
        %v338 = vmul.f32 %v306, 0.088388346
        %v339 = vmul.f32 %v307, 0.088388346
        %v340 = vmul.f32 %v308, 0.088388346
        %v341 = vmul.f32 %v309, 0.088388346
        %v342 = vmul.f32 %v310, 0.088388346
        %v343 = vmul.f32 %v311, 0.088388346
        %v344 = vmul.f32 %v312, 0.088388346
        %v345 = vmul.f32 %v313, 0.088388346
        %v346 = vmul.f32 %v314, 0.088388346
        %v347 = vmul.f32 %v315, 0.088388346
        %v348 = vmul.f32 %v316, 0.088388346
        %v349 = vmul.f32 %v317, 0.088388346
        %v350 = vmul.f32 %v318, 0.088388346
        %v351 = vmul.f32 %v319, 0.088388346
        %v352 = vmul.f32 %v320, 0.088388346
        %v353 = vmul.f32 %v321, 0.088388346
        %v354 = vmul.f32 %v322, 0.088388346
        %v355 = vmul.f32 %v323, 0.088388346
        %v356 = vld [vmem:[%s246] sm:$0xff]
        %v357 = vld [vmem:[%s246 + $0x8] sm:$0xff]
        %v358 = vld [vmem:[%s246 + $0x10] sm:$0xff]
        %v359 = vld [vmem:[%s246 + $0x18] sm:$0xff]
        %v360 = vld [vmem:[%s246 + $0x20] sm:$0xff]
        %v361 = vld [vmem:[%s246 + $0x28] sm:$0xff]
        %v362 = vld [vmem:[%s246 + $0x30] sm:$0xff]
        %v363 = vld [vmem:[%s246 + $0x38] sm:$0xff]
        %v364 = vld [vmem:[%s246 + $0x40] sm:$0xff]
        %v365 = vld [vmem:[%s246 + $0x48] sm:$0xff]
        %v366 = vld [vmem:[%s246 + $0x50] sm:$0xff]
        %v367 = vld [vmem:[%s246 + $0x58] sm:$0xff]
        %v368 = vld [vmem:[%s246 + $0x60] sm:$0xff]
        %v369 = vld [vmem:[%s246 + $0x68] sm:$0xff]
        %v370 = vld [vmem:[%s246 + $0x70] sm:$0xff]
        %v371 = vld [vmem:[%s246 + $0x78] sm:$0xff]
        %v372 = vld [vmem:[%s246 + $0x80] sm:$0xff]
        %v373 = vld [vmem:[%s246 + $0x88] sm:$0xff]
        %v374 = vld [vmem:[%s246 + $0x90] sm:$0xff]
        %v375 = vld [vmem:[%s246 + $0x98] sm:$0xff]
        %v376 = vld [vmem:[%s246 + $0xa0] sm:$0xff]
        %v377 = vld [vmem:[%s246 + $0xa8] sm:$0xff]
        %v378 = vld [vmem:[%s246 + $0xb0] sm:$0xff]
        %v379 = vld [vmem:[%s246 + $0xb8] sm:$0xff]
        %v380 = vld [vmem:[%s246 + $0xc0] sm:$0xff]
        %v381 = vld [vmem:[%s246 + $0xc8] sm:$0xff]
        %v382 = vld [vmem:[%s246 + $0xd0] sm:$0xff]
        %v383 = vld [vmem:[%s246 + $0xd8] sm:$0xff]
        %v384 = vld [vmem:[%s246 + $0xe0] sm:$0xff]
        %v385 = vld [vmem:[%s246 + $0xe8] sm:$0xff]
        %v386 = vld [vmem:[%s246 + $0xf0] sm:$0xff]
        %v387 = vld [vmem:[%s246 + $0xf8] sm:$0xff]
        %v388 = vpack.c.bf16 %v325, %v324
        %v389 = vpack.c.bf16 %v327, %v326
        %v390 = vpack.c.bf16 %v329, %v328
        %v391 = vpack.c.bf16 %v331, %v330
        %v392 = vpack.c.bf16 %v333, %v332
        %v393 = vpack.c.bf16 %v335, %v334
        %v394 = vpack.c.bf16 %v337, %v336
        %v395 = vpack.c.bf16 %v339, %v338
        %v396 = vpack.c.bf16 %v341, %v340
        %v397 = vpack.c.bf16 %v343, %v342
        %v398 = vpack.c.bf16 %v345, %v344
        %v399 = vpack.c.bf16 %v347, %v346
        %v400 = vpack.c.bf16 %v349, %v348
        %v401 = vpack.c.bf16 %v351, %v350
        %v402 = vpack.c.bf16 %v353, %v352
        %v403 = vpack.c.bf16 %v355, %v354
        %v404 = vpack.c.bf16 %v357, %v356
        %v405 = vpack.c.bf16 %v359, %v358
        %v406 = vpack.c.bf16 %v361, %v360
        %v407 = vpack.c.bf16 %v363, %v362
        %v408 = vpack.c.bf16 %v365, %v364
        %v409 = vpack.c.bf16 %v367, %v366
        %v410 = vpack.c.bf16 %v369, %v368
        %v411 = vpack.c.bf16 %v371, %v370
        %v412 = vpack.c.bf16 %v373, %v372
        %v413 = vpack.c.bf16 %v375, %v374
        %v414 = vpack.c.bf16 %v377, %v376
        %v415 = vpack.c.bf16 %v379, %v378
        %v416 = vpack.c.bf16 %v381, %v380
        %v417 = vpack.c.bf16 %v383, %v382
        %v418 = vpack.c.bf16 %v385, %v384
        %v419 = vpack.c.bf16 %v387, %v386
        %420 = vmatpush.bf16.xpose.msra.mxu0 %v411
        %421 = vmatpush.bf16.xpose.msra.mxu0 %v410
        %422 = vmatpush.bf16.xpose.msra.mxu0 %v409
        %423 = vmatpush.bf16.xpose.msra.mxu0 %v408
        %424 = vmatpush.bf16.xpose.msra.mxu0 %v407
        %425 = vmatpush.bf16.xpose.msra.mxu0 %v406
        %426 = vmatpush.bf16.xpose.msra.mxu0 %v405
        %427 = vmatpush.bf16.xpose.msra.mxu0 %v404
        %428 = vmatmul.bf16.gmra.mxu0 %v388
        %v429 = vpop.f32.mrf.mxu0
        %v430 = vadd.f32 0.0, %v429
        %v431 = vpop.f32.mrf.mxu0
        %v432 = vadd.f32 0.0, %v431
        %433 = vmatmul.bf16.gmra.mxu0 %v389
        %v434 = vpop.f32.mrf.mxu0
        %v435 = vadd.f32 0.0, %v434
        %v436 = vpop.f32.mrf.mxu0
        %v437 = vadd.f32 0.0, %v436
        %438 = vmatmul.bf16.gmra.mxu0 %v390
        %v439 = vpop.f32.mrf.mxu0
        %v440 = vadd.f32 0.0, %v439
        %v441 = vpop.f32.mrf.mxu0
        %v442 = vadd.f32 0.0, %v441
        %443 = vmatmul.bf16.gmra.mxu0 %v391
        %v444 = vpop.f32.mrf.mxu0
        %v445 = vadd.f32 0.0, %v444
        %v446 = vpop.f32.mrf.mxu0
        %v447 = vadd.f32 0.0, %v446
        %448 = vmatmul.bf16.gmra.mxu0 %v392
        %v449 = vpop.f32.mrf.mxu0
        %v450 = vadd.f32 0.0, %v449
        %v451 = vpop.f32.mrf.mxu0
        %v452 = vadd.f32 0.0, %v451
        %453 = vmatmul.bf16.gmra.mxu0 %v393
        %v454 = vpop.f32.mrf.mxu0
        %v455 = vadd.f32 0.0, %v454
        %v456 = vpop.f32.mrf.mxu0
        %v457 = vadd.f32 0.0, %v456
        %458 = vmatmul.bf16.gmra.mxu0 %v394
        %v459 = vpop.f32.mrf.mxu0
        %v460 = vadd.f32 0.0, %v459
        %v461 = vpop.f32.mrf.mxu0
        %v462 = vadd.f32 0.0, %v461
        %463 = vmatmul.bf16.gmra.mxu0 %v395
        %v464 = vpop.f32.mrf.mxu0
        %v465 = vadd.f32 0.0, %v464
        %v466 = vpop.f32.mrf.mxu0
        %v467 = vadd.f32 0.0, %v466
        %468 = vmatmul.bf16.gmra.mxu0 %v396
        %v469 = vpop.f32.mrf.mxu0
        %v470 = vadd.f32 0.0, %v469
        %v471 = vpop.f32.mrf.mxu0
        %v472 = vadd.f32 0.0, %v471
        %473 = vmatmul.bf16.gmra.mxu0 %v397
        %v474 = vpop.f32.mrf.mxu0
        %v475 = vadd.f32 0.0, %v474
        %v476 = vpop.f32.mrf.mxu0
        %v477 = vadd.f32 0.0, %v476
        %478 = vmatmul.bf16.gmra.mxu0 %v398
        %v479 = vpop.f32.mrf.mxu0
        %v480 = vadd.f32 0.0, %v479
        %v481 = vpop.f32.mrf.mxu0
        %v482 = vadd.f32 0.0, %v481
        %483 = vmatmul.bf16.gmra.mxu0 %v399
        %v484 = vpop.f32.mrf.mxu0
        %v485 = vadd.f32 0.0, %v484
        %v486 = vpop.f32.mrf.mxu0
        %v487 = vadd.f32 0.0, %v486
        %488 = vmatmul.bf16.gmra.mxu0 %v400
        %v489 = vpop.f32.mrf.mxu0
        %v490 = vadd.f32 0.0, %v489
        %v491 = vpop.f32.mrf.mxu0
        %v492 = vadd.f32 0.0, %v491
        %493 = vmatmul.bf16.gmra.mxu0 %v401
        %v494 = vpop.f32.mrf.mxu0
        %v495 = vadd.f32 0.0, %v494
        %v496 = vpop.f32.mrf.mxu0
        %v497 = vadd.f32 0.0, %v496
        %498 = vmatmul.bf16.gmra.mxu0 %v402
        %v499 = vpop.f32.mrf.mxu0
        %v500 = vadd.f32 0.0, %v499
        %v501 = vpop.f32.mrf.mxu0
        %v502 = vadd.f32 0.0, %v501
        %503 = vmatmul.bf16.gmra.mxu0 %v403
        %v504 = vpop.f32.mrf.mxu0
        %v505 = vadd.f32 0.0, %v504
        %v506 = vpop.f32.mrf.mxu0
        %v507 = vadd.f32 0.0, %v506
        %508 = vdwg.mxu0
        %509 = vmatpush.bf16.xpose.msra.mxu0 %v419
        %510 = vmatpush.bf16.xpose.msra.mxu0 %v418
        %511 = vmatpush.bf16.xpose.msra.mxu0 %v417
        %512 = vmatpush.bf16.xpose.msra.mxu0 %v416
        %513 = vmatpush.bf16.xpose.msra.mxu0 %v415
        %514 = vmatpush.bf16.xpose.msra.mxu0 %v414
        %515 = vmatpush.bf16.xpose.msra.mxu0 %v413
        %516 = vmatpush.bf16.xpose.msra.mxu0 %v412
        %517 = vmatmul.bf16.gmra.mxu0 %v388
        %v518 = vpop.f32.mrf.mxu0
        %v519 = vadd.f32 0.0, %v518
        %v520 = vpop.f32.mrf.mxu0
        %v521 = vadd.f32 0.0, %v520
        %522 = vmatmul.bf16.gmra.mxu0 %v389
        %v523 = vpop.f32.mrf.mxu0
        %v524 = vadd.f32 0.0, %v523
        %v525 = vpop.f32.mrf.mxu0
        %v526 = vadd.f32 0.0, %v525
        %527 = vmatmul.bf16.gmra.mxu0 %v390
        %v528 = vpop.f32.mrf.mxu0
        %v529 = vadd.f32 0.0, %v528
        %v530 = vpop.f32.mrf.mxu0
        %v531 = vadd.f32 0.0, %v530
        %532 = vmatmul.bf16.gmra.mxu0 %v391
        %v533 = vpop.f32.mrf.mxu0
        %v534 = vadd.f32 0.0, %v533
        %v535 = vpop.f32.mrf.mxu0
        %v536 = vadd.f32 0.0, %v535
        %537 = vmatmul.bf16.gmra.mxu0 %v392
        %v538 = vpop.f32.mrf.mxu0
        %v539 = vadd.f32 0.0, %v538
        %v540 = vpop.f32.mrf.mxu0
        %v541 = vadd.f32 0.0, %v540
        %542 = vmatmul.bf16.gmra.mxu0 %v393
        %v543 = vpop.f32.mrf.mxu0
        %v544 = vadd.f32 0.0, %v543
        %v545 = vpop.f32.mrf.mxu0
        %v546 = vadd.f32 0.0, %v545
        %547 = vmatmul.bf16.gmra.mxu0 %v394
        %v548 = vpop.f32.mrf.mxu0
        %v549 = vadd.f32 0.0, %v548
        %v550 = vpop.f32.mrf.mxu0
        %v551 = vadd.f32 0.0, %v550
        %552 = vmatmul.bf16.gmra.mxu0 %v395
        %v553 = vpop.f32.mrf.mxu0
        %v554 = vadd.f32 0.0, %v553
        %v555 = vpop.f32.mrf.mxu0
        %v556 = vadd.f32 0.0, %v555
        %557 = vmatmul.bf16.gmra.mxu0 %v396
        %v558 = vpop.f32.mrf.mxu0
        %v559 = vadd.f32 0.0, %v558
        %v560 = vpop.f32.mrf.mxu0
        %v561 = vadd.f32 0.0, %v560
        %562 = vmatmul.bf16.gmra.mxu0 %v397
        %v563 = vpop.f32.mrf.mxu0
        %v564 = vadd.f32 0.0, %v563
        %v565 = vpop.f32.mrf.mxu0
        %v566 = vadd.f32 0.0, %v565
        %567 = vmatmul.bf16.gmra.mxu0 %v398
        %v568 = vpop.f32.mrf.mxu0
        %v569 = vadd.f32 0.0, %v568
        %v570 = vpop.f32.mrf.mxu0
        %v571 = vadd.f32 0.0, %v570
        %572 = vmatmul.bf16.gmra.mxu0 %v399
        %v573 = vpop.f32.mrf.mxu0
        %v574 = vadd.f32 0.0, %v573
        %v575 = vpop.f32.mrf.mxu0
        %v576 = vadd.f32 0.0, %v575
        %577 = vmatmul.bf16.gmra.mxu0 %v400
        %v578 = vpop.f32.mrf.mxu0
        %v579 = vadd.f32 0.0, %v578
        %v580 = vpop.f32.mrf.mxu0
        %v581 = vadd.f32 0.0, %v580
        %582 = vmatmul.bf16.gmra.mxu0 %v401
        %v583 = vpop.f32.mrf.mxu0
        %v584 = vadd.f32 0.0, %v583
        %v585 = vpop.f32.mrf.mxu0
        %v586 = vadd.f32 0.0, %v585
        %587 = vmatmul.bf16.gmra.mxu0 %v402
        %v588 = vpop.f32.mrf.mxu0
        %v589 = vadd.f32 0.0, %v588
        %v590 = vpop.f32.mrf.mxu0
        %v591 = vadd.f32 0.0, %v590
        %592 = vmatmul.bf16.gmra.mxu0 %v403
        %v593 = vpop.f32.mrf.mxu0
        %v594 = vadd.f32 0.0, %v593
        %v595 = vpop.f32.mrf.mxu0
        %v596 = vadd.f32 0.0, %v595
        %597 = vdwg.mxu0
        %v598 = vmax.f32 %v430, %v519
        %599 = vmax.xlane.f32.xlu0 %v598
        %v600 = vpop.xlane.xlu0 %599
        %v601 = vmax.f32 %v432, %v521
        %602 = vmax.xlane.f32.xlu0 %v601
        %v603 = vpop.xlane.xlu0 %602
        %v604 = vmax.f32 %v435, %v524
        %605 = vmax.xlane.f32.xlu0 %v604
        %v606 = vpop.xlane.xlu0 %605
        %v607 = vmax.f32 %v437, %v526
        %608 = vmax.xlane.f32.xlu0 %v607
        %v609 = vpop.xlane.xlu0 %608
        %v610 = vmax.f32 %v440, %v529
        %611 = vmax.xlane.f32.xlu0 %v610
        %v612 = vpop.xlane.xlu0 %611
        %v613 = vmax.f32 %v442, %v531
        %614 = vmax.xlane.f32.xlu0 %v613
        %v615 = vpop.xlane.xlu0 %614
        %v616 = vmax.f32 %v445, %v534
        %617 = vmax.xlane.f32.xlu0 %v616
        %v618 = vpop.xlane.xlu0 %617
        %v619 = vmax.f32 %v447, %v536
        %620 = vmax.xlane.f32.xlu0 %v619
        %v621 = vpop.xlane.xlu0 %620
        %v622 = vmax.f32 %v450, %v539
        %623 = vmax.xlane.f32.xlu0 %v622
        %v624 = vpop.xlane.xlu0 %623
        %v625 = vmax.f32 %v452, %v541
        %626 = vmax.xlane.f32.xlu0 %v625
        %v627 = vpop.xlane.xlu0 %626
        %v628 = vmax.f32 %v455, %v544
        %629 = vmax.xlane.f32.xlu0 %v628
        %v630 = vpop.xlane.xlu0 %629
        %v631 = vmax.f32 %v457, %v546
        %632 = vmax.xlane.f32.xlu0 %v631
        %v633 = vpop.xlane.xlu0 %632
        %v634 = vmax.f32 %v460, %v549
        %635 = vmax.xlane.f32.xlu0 %v634
        %v636 = vpop.xlane.xlu0 %635
        %v637 = vmax.f32 %v462, %v551
        %638 = vmax.xlane.f32.xlu0 %v637
        %v639 = vpop.xlane.xlu0 %638
        %v640 = vmax.f32 %v465, %v554
        %641 = vmax.xlane.f32.xlu0 %v640
        %v642 = vpop.xlane.xlu0 %641
        %v643 = vmax.f32 %v467, %v556
        %644 = vmax.xlane.f32.xlu0 %v643
        %v645 = vpop.xlane.xlu0 %644
        %v646 = vmax.f32 %v470, %v559
        %647 = vmax.xlane.f32.xlu0 %v646
        %v648 = vpop.xlane.xlu0 %647
        %v649 = vmax.f32 %v472, %v561
        %650 = vmax.xlane.f32.xlu0 %v649
        %v651 = vpop.xlane.xlu0 %650
        %v652 = vmax.f32 %v475, %v564
        %653 = vmax.xlane.f32.xlu0 %v652
        %v654 = vpop.xlane.xlu0 %653
        %v655 = vmax.f32 %v477, %v566
        %656 = vmax.xlane.f32.xlu0 %v655
        %v657 = vpop.xlane.xlu0 %656
        %v658 = vmax.f32 %v480, %v569
        %659 = vmax.xlane.f32.xlu0 %v658
        %v660 = vpop.xlane.xlu0 %659
        %v661 = vmax.f32 %v482, %v571
        %662 = vmax.xlane.f32.xlu0 %v661
        %v663 = vpop.xlane.xlu0 %662
        %v664 = vmax.f32 %v485, %v574
        %665 = vmax.xlane.f32.xlu0 %v664
        %v666 = vpop.xlane.xlu0 %665
        %v667 = vmax.f32 %v487, %v576
        %668 = vmax.xlane.f32.xlu0 %v667
        %v669 = vpop.xlane.xlu0 %668
        %v670 = vmax.f32 %v490, %v579
        %671 = vmax.xlane.f32.xlu0 %v670
        %v672 = vpop.xlane.xlu0 %671
        %v673 = vmax.f32 %v492, %v581
        %674 = vmax.xlane.f32.xlu0 %v673
        %v675 = vpop.xlane.xlu0 %674
        %v676 = vmax.f32 %v495, %v584
        %677 = vmax.xlane.f32.xlu0 %v676
        %v678 = vpop.xlane.xlu0 %677
        %v679 = vmax.f32 %v497, %v586
        %680 = vmax.xlane.f32.xlu0 %v679
        %v681 = vpop.xlane.xlu0 %680
        %v682 = vmax.f32 %v500, %v589
        %683 = vmax.xlane.f32.xlu0 %v682
        %v684 = vpop.xlane.xlu0 %683
        %v685 = vmax.f32 %v502, %v591
        %686 = vmax.xlane.f32.xlu0 %v685
        %v687 = vpop.xlane.xlu0 %686
        %v688 = vmax.f32 %v505, %v594
        %689 = vmax.xlane.f32.xlu0 %v688
        %v690 = vpop.xlane.xlu0 %689
        %v691 = vmax.f32 %v507, %v596
        %692 = vmax.xlane.f32.xlu0 %v691
        %v693 = vpop.xlane.xlu0 %692
        %v694 = vsub.f32 %v430, %v600
        %v695 = vsub.f32 %v519, %v600
        %v696 = vsub.f32 %v432, %v603
        %v697 = vsub.f32 %v521, %v603
        %v698 = vsub.f32 %v435, %v606
        %v699 = vsub.f32 %v524, %v606
        %v700 = vsub.f32 %v437, %v609
        %v701 = vsub.f32 %v526, %v609
        %v702 = vsub.f32 %v440, %v612
        %v703 = vsub.f32 %v529, %v612
        %v704 = vsub.f32 %v442, %v615
        %v705 = vsub.f32 %v531, %v615
        %v706 = vsub.f32 %v445, %v618
        %v707 = vsub.f32 %v534, %v618
        %v708 = vsub.f32 %v447, %v621
        %v709 = vsub.f32 %v536, %v621
        %v710 = vsub.f32 %v450, %v624
        %v711 = vsub.f32 %v539, %v624
        %v712 = vsub.f32 %v452, %v627
        %v713 = vsub.f32 %v541, %v627
        %v714 = vsub.f32 %v455, %v630
        %v715 = vsub.f32 %v544, %v630
        %v716 = vsub.f32 %v457, %v633
        %v717 = vsub.f32 %v546, %v633
        %v718 = vsub.f32 %v460, %v636
        %v719 = vsub.f32 %v549, %v636
        %v720 = vsub.f32 %v462, %v639
        %v721 = vsub.f32 %v551, %v639
        %v722 = vsub.f32 %v465, %v642
        %v723 = vsub.f32 %v554, %v642
        %v724 = vsub.f32 %v467, %v645
        %v725 = vsub.f32 %v556, %v645
        %v726 = vsub.f32 %v470, %v648
        %v727 = vsub.f32 %v559, %v648
        %v728 = vsub.f32 %v472, %v651
        %v729 = vsub.f32 %v561, %v651
        %v730 = vsub.f32 %v475, %v654
        %v731 = vsub.f32 %v564, %v654
        %v732 = vsub.f32 %v477, %v657
        %v733 = vsub.f32 %v566, %v657
        %v734 = vsub.f32 %v480, %v660
        %v735 = vsub.f32 %v569, %v660
        %v736 = vsub.f32 %v482, %v663
        %v737 = vsub.f32 %v571, %v663
        %v738 = vsub.f32 %v485, %v666
        %v739 = vsub.f32 %v574, %v666
        %v740 = vsub.f32 %v487, %v669
        %v741 = vsub.f32 %v576, %v669
        %v742 = vsub.f32 %v490, %v672
        %v743 = vsub.f32 %v579, %v672
        %v744 = vsub.f32 %v492, %v675
        %v745 = vsub.f32 %v581, %v675
        %v746 = vsub.f32 %v495, %v678
        %v747 = vsub.f32 %v584, %v678
        %v748 = vsub.f32 %v497, %v681
        %v749 = vsub.f32 %v586, %v681
        %v750 = vsub.f32 %v500, %v684
        %v751 = vsub.f32 %v589, %v684
        %v752 = vsub.f32 %v502, %v687
        %v753 = vsub.f32 %v591, %v687
        %v754 = vsub.f32 %v505, %v690
        %v755 = vsub.f32 %v594, %v690
        %v756 = vsub.f32 %v507, %v693
        %v757 = vsub.f32 %v596, %v693
        %v758 = vmul.f32 %v694, 1.442695
        %v759 = vpow.pop %v758
        %v760 = vmul.f32 %v695, 1.442695
        %v761 = vpow.pop %v760
        %v762 = vmul.f32 %v696, 1.442695
        %v763 = vpow.pop %v762
        %v764 = vmul.f32 %v697, 1.442695
        %v765 = vpow.pop %v764
        %v766 = vmul.f32 %v698, 1.442695
        %v767 = vpow.pop %v766
        %v768 = vmul.f32 %v699, 1.442695
        %v769 = vpow.pop %v768
        %v770 = vmul.f32 %v700, 1.442695
        %v771 = vpow.pop %v770
        %v772 = vmul.f32 %v701, 1.442695
        %v773 = vpow.pop %v772
        %v774 = vmul.f32 %v702, 1.442695
        %v775 = vpow.pop %v774
        %v776 = vmul.f32 %v703, 1.442695
        %v777 = vpow.pop %v776
        %v778 = vmul.f32 %v704, 1.442695
        %v779 = vpow.pop %v778
        %v780 = vmul.f32 %v705, 1.442695
        %v781 = vpow.pop %v780
        %v782 = vmul.f32 %v706, 1.442695
        %v783 = vpow.pop %v782
        %v784 = vmul.f32 %v707, 1.442695
        %v785 = vpow.pop %v784
        %v786 = vmul.f32 %v708, 1.442695
        %v787 = vpow.pop %v786
        %v788 = vmul.f32 %v709, 1.442695
        %v789 = vpow.pop %v788
        %v790 = vmul.f32 %v710, 1.442695
        %v791 = vpow.pop %v790
        %v792 = vmul.f32 %v711, 1.442695
        %v793 = vpow.pop %v792
        %v794 = vmul.f32 %v712, 1.442695
        %v795 = vpow.pop %v794
        %v796 = vmul.f32 %v713, 1.442695
        %v797 = vpow.pop %v796
        %v798 = vmul.f32 %v714, 1.442695
        %v799 = vpow.pop %v798
        %v800 = vmul.f32 %v715, 1.442695
        %v801 = vpow.pop %v800
        %v802 = vmul.f32 %v716, 1.442695
        %v803 = vpow.pop %v802
        %v804 = vmul.f32 %v717, 1.442695
        %v805 = vpow.pop %v804
        %v806 = vmul.f32 %v718, 1.442695
        %v807 = vpow.pop %v806
        %v808 = vmul.f32 %v719, 1.442695
        %v809 = vpow.pop %v808
        %v810 = vmul.f32 %v720, 1.442695
        %v811 = vpow.pop %v810
        %v812 = vmul.f32 %v721, 1.442695
        %v813 = vpow.pop %v812
        %v814 = vmul.f32 %v722, 1.442695
        %v815 = vpow.pop %v814
        %v816 = vmul.f32 %v723, 1.442695
        %v817 = vpow.pop %v816
        %v818 = vmul.f32 %v724, 1.442695
        %v819 = vpow.pop %v818
        %v820 = vmul.f32 %v725, 1.442695
        %v821 = vpow.pop %v820
        %v822 = vmul.f32 %v726, 1.442695
        %v823 = vpow.pop %v822
        %v824 = vmul.f32 %v727, 1.442695
        %v825 = vpow.pop %v824
        %v826 = vmul.f32 %v728, 1.442695
        %v827 = vpow.pop %v826
        %v828 = vmul.f32 %v729, 1.442695
        %v829 = vpow.pop %v828
        %v830 = vmul.f32 %v730, 1.442695
        %v831 = vpow.pop %v830
        %v832 = vmul.f32 %v731, 1.442695
        %v833 = vpow.pop %v832
        %v834 = vmul.f32 %v732, 1.442695
        %v835 = vpow.pop %v834
        %v836 = vmul.f32 %v733, 1.442695
        %v837 = vpow.pop %v836
        %v838 = vmul.f32 %v734, 1.442695
        %v839 = vpow.pop %v838
        %v840 = vmul.f32 %v735, 1.442695
        %v841 = vpow.pop %v840
        %v842 = vmul.f32 %v736, 1.442695
        %v843 = vpow.pop %v842
        %v844 = vmul.f32 %v737, 1.442695
        %v845 = vpow.pop %v844
        %v846 = vmul.f32 %v738, 1.442695
        %v847 = vpow.pop %v846
        %v848 = vmul.f32 %v739, 1.442695
        %v849 = vpow.pop %v848
        %v850 = vmul.f32 %v740, 1.442695
        %v851 = vpow.pop %v850
        %v852 = vmul.f32 %v741, 1.442695
        %v853 = vpow.pop %v852
        %v854 = vmul.f32 %v742, 1.442695
        %v855 = vpow.pop %v854
        %v856 = vmul.f32 %v743, 1.442695
        %v857 = vpow.pop %v856
        %v858 = vmul.f32 %v744, 1.442695
        %v859 = vpow.pop %v858
        %v860 = vmul.f32 %v745, 1.442695
        %v861 = vpow.pop %v860
        %v862 = vmul.f32 %v746, 1.442695
        %v863 = vpow.pop %v862
        %v864 = vmul.f32 %v747, 1.442695
        %v865 = vpow.pop %v864
        %v866 = vmul.f32 %v748, 1.442695
        %v867 = vpow.pop %v866
        %v868 = vmul.f32 %v749, 1.442695
        %v869 = vpow.pop %v868
        %v870 = vmul.f32 %v750, 1.442695
        %v871 = vpow.pop %v870
        %v872 = vmul.f32 %v751, 1.442695
        %v873 = vpow.pop %v872
        %v874 = vmul.f32 %v752, 1.442695
        %v875 = vpow.pop %v874
        %v876 = vmul.f32 %v753, 1.442695
        %v877 = vpow.pop %v876
        %v878 = vmul.f32 %v754, 1.442695
        %v879 = vpow.pop %v878
        %v880 = vmul.f32 %v755, 1.442695
        %v881 = vpow.pop %v880
        %v882 = vmul.f32 %v756, 1.442695
        %v883 = vpow.pop %v882
        %v884 = vmul.f32 %v757, 1.442695
        %v885 = vpow.pop %v884
        %v886 = vadd.f32 %v759, %v761
        %887 = vadd.xlane.f32.xlu0 %v886
        %v888 = vpop.xlane.xlu0 %887
        %v889 = vadd.f32 %v763, %v765
        %890 = vadd.xlane.f32.xlu0 %v889
        %v891 = vpop.xlane.xlu0 %890
        %v892 = vadd.f32 %v767, %v769
        %893 = vadd.xlane.f32.xlu0 %v892
        %v894 = vpop.xlane.xlu0 %893
        %v895 = vadd.f32 %v771, %v773
        %896 = vadd.xlane.f32.xlu0 %v895
        %v897 = vpop.xlane.xlu0 %896
        %v898 = vadd.f32 %v775, %v777
        %899 = vadd.xlane.f32.xlu0 %v898
        %v900 = vpop.xlane.xlu0 %899
        %v901 = vadd.f32 %v779, %v781
        %902 = vadd.xlane.f32.xlu0 %v901
        %v903 = vpop.xlane.xlu0 %902
        %v904 = vadd.f32 %v783, %v785
        %905 = vadd.xlane.f32.xlu0 %v904
        %v906 = vpop.xlane.xlu0 %905
        %v907 = vadd.f32 %v787, %v789
        %908 = vadd.xlane.f32.xlu0 %v907
        %v909 = vpop.xlane.xlu0 %908
        %v910 = vadd.f32 %v791, %v793
        %911 = vadd.xlane.f32.xlu0 %v910
        %v912 = vpop.xlane.xlu0 %911
        %v913 = vadd.f32 %v795, %v797
        %914 = vadd.xlane.f32.xlu0 %v913
        %v915 = vpop.xlane.xlu0 %914
        %v916 = vadd.f32 %v799, %v801
        %917 = vadd.xlane.f32.xlu0 %v916
        %v918 = vpop.xlane.xlu0 %917
        %v919 = vadd.f32 %v803, %v805
        %920 = vadd.xlane.f32.xlu0 %v919
        %v921 = vpop.xlane.xlu0 %920
        %v922 = vadd.f32 %v807, %v809
        %923 = vadd.xlane.f32.xlu0 %v922
        %v924 = vpop.xlane.xlu0 %923
        %v925 = vadd.f32 %v811, %v813
        %926 = vadd.xlane.f32.xlu0 %v925
        %v927 = vpop.xlane.xlu0 %926
        %v928 = vadd.f32 %v815, %v817
        %929 = vadd.xlane.f32.xlu0 %v928
        %v930 = vpop.xlane.xlu0 %929
        %v931 = vadd.f32 %v819, %v821
        %932 = vadd.xlane.f32.xlu0 %v931
        %v933 = vpop.xlane.xlu0 %932
        %v934 = vadd.f32 %v823, %v825
        %935 = vadd.xlane.f32.xlu0 %v934
        %v936 = vpop.xlane.xlu0 %935
        %v937 = vadd.f32 %v827, %v829
        %938 = vadd.xlane.f32.xlu0 %v937
        %v939 = vpop.xlane.xlu0 %938
        %v940 = vadd.f32 %v831, %v833
        %941 = vadd.xlane.f32.xlu0 %v940
        %v942 = vpop.xlane.xlu0 %941
        %v943 = vadd.f32 %v835, %v837
        %944 = vadd.xlane.f32.xlu0 %v943
        %v945 = vpop.xlane.xlu0 %944
        %v946 = vadd.f32 %v839, %v841
        %947 = vadd.xlane.f32.xlu0 %v946
        %v948 = vpop.xlane.xlu0 %947
        %v949 = vadd.f32 %v843, %v845
        %950 = vadd.xlane.f32.xlu0 %v949
        %v951 = vpop.xlane.xlu0 %950
        %v952 = vadd.f32 %v847, %v849
        %953 = vadd.xlane.f32.xlu0 %v952
        %v954 = vpop.xlane.xlu0 %953
        %v955 = vadd.f32 %v851, %v853
        %956 = vadd.xlane.f32.xlu0 %v955
        %v957 = vpop.xlane.xlu0 %956
        %v958 = vadd.f32 %v855, %v857
        %959 = vadd.xlane.f32.xlu0 %v958
        %v960 = vpop.xlane.xlu0 %959
        %v961 = vadd.f32 %v859, %v861
        %962 = vadd.xlane.f32.xlu0 %v961
        %v963 = vpop.xlane.xlu0 %962
        %v964 = vadd.f32 %v863, %v865
        %965 = vadd.xlane.f32.xlu0 %v964
        %v966 = vpop.xlane.xlu0 %965
        %v967 = vadd.f32 %v867, %v869
        %968 = vadd.xlane.f32.xlu0 %v967
        %v969 = vpop.xlane.xlu0 %968
        %v970 = vadd.f32 %v871, %v873
        %971 = vadd.xlane.f32.xlu0 %v970
        %v972 = vpop.xlane.xlu0 %971
        %v973 = vadd.f32 %v875, %v877
        %974 = vadd.xlane.f32.xlu0 %v973
        %v975 = vpop.xlane.xlu0 %974
        %v976 = vadd.f32 %v879, %v881
        %977 = vadd.xlane.f32.xlu0 %v976
        %v978 = vpop.xlane.xlu0 %977
        %v979 = vadd.f32 %v883, %v885
        %980 = vadd.xlane.f32.xlu0 %v979
        %v981 = vpop.xlane.xlu0 %980
        %v982 = vpack.c.bf16 %v763, %v759
        %v983 = vpack.c.bf16 %v765, %v761
        %v984 = vpack.c.bf16 %v771, %v767
        %v985 = vpack.c.bf16 %v773, %v769
        %v986 = vpack.c.bf16 %v779, %v775
        %v987 = vpack.c.bf16 %v781, %v777
        %v988 = vpack.c.bf16 %v787, %v783
        %v989 = vpack.c.bf16 %v789, %v785
        %v990 = vpack.c.bf16 %v795, %v791
        %v991 = vpack.c.bf16 %v797, %v793
        %v992 = vpack.c.bf16 %v803, %v799
        %v993 = vpack.c.bf16 %v805, %v801
        %v994 = vpack.c.bf16 %v811, %v807
        %v995 = vpack.c.bf16 %v813, %v809
        %v996 = vpack.c.bf16 %v819, %v815
        %v997 = vpack.c.bf16 %v821, %v817
        %v998 = vpack.c.bf16 %v827, %v823
        %v999 = vpack.c.bf16 %v829, %v825
        %v1000 = vpack.c.bf16 %v835, %v831
        %v1001 = vpack.c.bf16 %v837, %v833
        %v1002 = vpack.c.bf16 %v843, %v839
        %v1003 = vpack.c.bf16 %v845, %v841
        %v1004 = vpack.c.bf16 %v851, %v847
        %v1005 = vpack.c.bf16 %v853, %v849
        %v1006 = vpack.c.bf16 %v859, %v855
        %v1007 = vpack.c.bf16 %v861, %v857
        %v1008 = vpack.c.bf16 %v867, %v863
        %v1009 = vpack.c.bf16 %v869, %v865
        %v1010 = vpack.c.bf16 %v875, %v871
        %v1011 = vpack.c.bf16 %v877, %v873
        %v1012 = vpack.c.bf16 %v883, %v879
        %v1013 = vpack.c.bf16 %v885, %v881
        %v1014 = vld [vmem:[%s256] sm:$0xff]
        %v1015 = vld [vmem:[%s256 + $0x8] sm:$0xff]
        %v1016 = vld [vmem:[%s256 + $0x10] sm:$0xff]
        %v1017 = vld [vmem:[%s256 + $0x18] sm:$0xff]
        %v1018 = vld [vmem:[%s256 + $0x20] sm:$0xff]
        %v1019 = vld [vmem:[%s256 + $0x28] sm:$0xff]
        %v1020 = vld [vmem:[%s256 + $0x30] sm:$0xff]
        %v1021 = vld [vmem:[%s256 + $0x38] sm:$0xff]
        %v1022 = vld [vmem:[%s256 + $0x40] sm:$0xff]
        %v1023 = vld [vmem:[%s256 + $0x48] sm:$0xff]
        %v1024 = vld [vmem:[%s256 + $0x50] sm:$0xff]
        %v1025 = vld [vmem:[%s256 + $0x58] sm:$0xff]
        %v1026 = vld [vmem:[%s256 + $0x60] sm:$0xff]
        %v1027 = vld [vmem:[%s256 + $0x68] sm:$0xff]
        %v1028 = vld [vmem:[%s256 + $0x70] sm:$0xff]
        %v1029 = vld [vmem:[%s256 + $0x78] sm:$0xff]
        %v1030 = vld [vmem:[%s256 + $0x80] sm:$0xff]
        %v1031 = vld [vmem:[%s256 + $0x88] sm:$0xff]
        %v1032 = vld [vmem:[%s256 + $0x90] sm:$0xff]
        %v1033 = vld [vmem:[%s256 + $0x98] sm:$0xff]
        %v1034 = vld [vmem:[%s256 + $0xa0] sm:$0xff]
        %v1035 = vld [vmem:[%s256 + $0xa8] sm:$0xff]
        %v1036 = vld [vmem:[%s256 + $0xb0] sm:$0xff]
        %v1037 = vld [vmem:[%s256 + $0xb8] sm:$0xff]
        %v1038 = vld [vmem:[%s256 + $0xc0] sm:$0xff]
        %v1039 = vld [vmem:[%s256 + $0xc8] sm:$0xff]
        %v1040 = vld [vmem:[%s256 + $0xd0] sm:$0xff]
        %v1041 = vld [vmem:[%s256 + $0xd8] sm:$0xff]
        %v1042 = vld [vmem:[%s256 + $0xe0] sm:$0xff]
        %v1043 = vld [vmem:[%s256 + $0xe8] sm:$0xff]
        %v1044 = vld [vmem:[%s256 + $0xf0] sm:$0xff]
        %v1045 = vld [vmem:[%s256 + $0xf8] sm:$0xff]
        %v1046 = vpack.c.bf16 %v1015, %v1014
        %v1047 = vpack.c.bf16 %v1017, %v1016
        %v1048 = vpack.c.bf16 %v1019, %v1018
        %v1049 = vpack.c.bf16 %v1021, %v1020
        %v1050 = vpack.c.bf16 %v1023, %v1022
        %v1051 = vpack.c.bf16 %v1025, %v1024
        %v1052 = vpack.c.bf16 %v1027, %v1026
        %v1053 = vpack.c.bf16 %v1029, %v1028
        %v1054 = vpack.c.bf16 %v1031, %v1030
        %v1055 = vpack.c.bf16 %v1033, %v1032
        %v1056 = vpack.c.bf16 %v1035, %v1034
        %v1057 = vpack.c.bf16 %v1037, %v1036
        %v1058 = vpack.c.bf16 %v1039, %v1038
        %v1059 = vpack.c.bf16 %v1041, %v1040
        %v1060 = vpack.c.bf16 %v1043, %v1042
        %v1061 = vpack.c.bf16 %v1045, %v1044
        %1062 = vmatpush.bf16.msra.mxu0 %v1053
        %1063 = vmatpush.bf16.msra.mxu0 %v1052
        %1064 = vmatpush.bf16.msra.mxu0 %v1051
        %1065 = vmatpush.bf16.msra.mxu0 %v1050
        %1066 = vmatpush.bf16.msra.mxu0 %v1049
        %1067 = vmatpush.bf16.msra.mxu0 %v1048
        %1068 = vmatpush.bf16.msra.mxu0 %v1047
        %1069 = vmatpush.bf16.msra.mxu0 %v1046
        %1070 = vmatmul.bf16.gmra.mxu0 %v982
        %v1071 = vpop.f32.mrf.mxu0
        %v1072 = vadd.f32 0.0, %v1071
        %v1073 = vpop.f32.mrf.mxu0
        %v1074 = vadd.f32 0.0, %v1073
        %1075 = vmatmul.bf16.gmra.mxu0 %v984
        %v1076 = vpop.f32.mrf.mxu0
        %v1077 = vadd.f32 0.0, %v1076
        %v1078 = vpop.f32.mrf.mxu0
        %v1079 = vadd.f32 0.0, %v1078
        %1080 = vmatmul.bf16.gmra.mxu0 %v986
        %v1081 = vpop.f32.mrf.mxu0
        %v1082 = vadd.f32 0.0, %v1081
        %v1083 = vpop.f32.mrf.mxu0
        %v1084 = vadd.f32 0.0, %v1083
        %1085 = vmatmul.bf16.gmra.mxu0 %v988
        %v1086 = vpop.f32.mrf.mxu0
        %v1087 = vadd.f32 0.0, %v1086
        %v1088 = vpop.f32.mrf.mxu0
        %v1089 = vadd.f32 0.0, %v1088
        %1090 = vmatmul.bf16.gmra.mxu0 %v990
        %v1091 = vpop.f32.mrf.mxu0
        %v1092 = vadd.f32 0.0, %v1091
        %v1093 = vpop.f32.mrf.mxu0
        %v1094 = vadd.f32 0.0, %v1093
        %1095 = vmatmul.bf16.gmra.mxu0 %v992
        %v1096 = vpop.f32.mrf.mxu0
        %v1097 = vadd.f32 0.0, %v1096
        %v1098 = vpop.f32.mrf.mxu0
        %v1099 = vadd.f32 0.0, %v1098
        %1100 = vmatmul.bf16.gmra.mxu0 %v994
        %v1101 = vpop.f32.mrf.mxu0
        %v1102 = vadd.f32 0.0, %v1101
        %v1103 = vpop.f32.mrf.mxu0
        %v1104 = vadd.f32 0.0, %v1103
        %1105 = vmatmul.bf16.gmra.mxu0 %v996
        %v1106 = vpop.f32.mrf.mxu0
        %v1107 = vadd.f32 0.0, %v1106
        %v1108 = vpop.f32.mrf.mxu0
        %v1109 = vadd.f32 0.0, %v1108
        %1110 = vmatmul.bf16.gmra.mxu0 %v998
        %v1111 = vpop.f32.mrf.mxu0
        %v1112 = vadd.f32 0.0, %v1111
        %v1113 = vpop.f32.mrf.mxu0
        %v1114 = vadd.f32 0.0, %v1113
        %1115 = vmatmul.bf16.gmra.mxu0 %v1000
        %v1116 = vpop.f32.mrf.mxu0
        %v1117 = vadd.f32 0.0, %v1116
        %v1118 = vpop.f32.mrf.mxu0
        %v1119 = vadd.f32 0.0, %v1118
        %1120 = vmatmul.bf16.gmra.mxu0 %v1002
        %v1121 = vpop.f32.mrf.mxu0
        %v1122 = vadd.f32 0.0, %v1121
        %v1123 = vpop.f32.mrf.mxu0
        %v1124 = vadd.f32 0.0, %v1123
        %1125 = vmatmul.bf16.gmra.mxu0 %v1004
        %v1126 = vpop.f32.mrf.mxu0
        %v1127 = vadd.f32 0.0, %v1126
        %v1128 = vpop.f32.mrf.mxu0
        %v1129 = vadd.f32 0.0, %v1128
        %1130 = vmatmul.bf16.gmra.mxu0 %v1006
        %v1131 = vpop.f32.mrf.mxu0
        %v1132 = vadd.f32 0.0, %v1131
        %v1133 = vpop.f32.mrf.mxu0
        %v1134 = vadd.f32 0.0, %v1133
        %1135 = vmatmul.bf16.gmra.mxu0 %v1008
        %v1136 = vpop.f32.mrf.mxu0
        %v1137 = vadd.f32 0.0, %v1136
        %v1138 = vpop.f32.mrf.mxu0
        %v1139 = vadd.f32 0.0, %v1138
        %1140 = vmatmul.bf16.gmra.mxu0 %v1010
        %v1141 = vpop.f32.mrf.mxu0
        %v1142 = vadd.f32 0.0, %v1141
        %v1143 = vpop.f32.mrf.mxu0
        %v1144 = vadd.f32 0.0, %v1143
        %1145 = vmatmul.bf16.gmra.mxu0 %v1012
        %v1146 = vpop.f32.mrf.mxu0
        %v1147 = vadd.f32 0.0, %v1146
        %v1148 = vpop.f32.mrf.mxu0
        %v1149 = vadd.f32 0.0, %v1148
        %1150 = vdwg.mxu0
        %1151 = vmatpush.bf16.msra.mxu0 %v1061
        %1152 = vmatpush.bf16.msra.mxu0 %v1060
        %1153 = vmatpush.bf16.msra.mxu0 %v1059
        %1154 = vmatpush.bf16.msra.mxu0 %v1058
        %1155 = vmatpush.bf16.msra.mxu0 %v1057
        %1156 = vmatpush.bf16.msra.mxu0 %v1056
        %1157 = vmatpush.bf16.msra.mxu0 %v1055
        %1158 = vmatpush.bf16.msra.mxu0 %v1054
        %1159 = vmatmul.bf16.gmra.mxu0 %v983
        %v1160 = vpop.f32.mrf.mxu0
        %v1161 = vadd.f32 %v1072, %v1160
        %v1162 = vpop.f32.mrf.mxu0
        %v1163 = vadd.f32 %v1074, %v1162
        %1164 = vmatmul.bf16.gmra.mxu0 %v985
        %v1165 = vpop.f32.mrf.mxu0
        %v1166 = vadd.f32 %v1077, %v1165
        %v1167 = vpop.f32.mrf.mxu0
        %v1168 = vadd.f32 %v1079, %v1167
        %1169 = vmatmul.bf16.gmra.mxu0 %v987
        %v1170 = vpop.f32.mrf.mxu0
        %v1171 = vadd.f32 %v1082, %v1170
        %v1172 = vpop.f32.mrf.mxu0
        %v1173 = vadd.f32 %v1084, %v1172
        %1174 = vmatmul.bf16.gmra.mxu0 %v989
        %v1175 = vpop.f32.mrf.mxu0
        %v1176 = vadd.f32 %v1087, %v1175
        %v1177 = vpop.f32.mrf.mxu0
        %v1178 = vadd.f32 %v1089, %v1177
        %1179 = vmatmul.bf16.gmra.mxu0 %v991
        %v1180 = vpop.f32.mrf.mxu0
        %v1181 = vadd.f32 %v1092, %v1180
        %v1182 = vpop.f32.mrf.mxu0
        %v1183 = vadd.f32 %v1094, %v1182
        %1184 = vmatmul.bf16.gmra.mxu0 %v993
        %v1185 = vpop.f32.mrf.mxu0
        %v1186 = vadd.f32 %v1097, %v1185
        %v1187 = vpop.f32.mrf.mxu0
        %v1188 = vadd.f32 %v1099, %v1187
        %1189 = vmatmul.bf16.gmra.mxu0 %v995
        %v1190 = vpop.f32.mrf.mxu0
        %v1191 = vadd.f32 %v1102, %v1190
        %v1192 = vpop.f32.mrf.mxu0
        %v1193 = vadd.f32 %v1104, %v1192
        %1194 = vmatmul.bf16.gmra.mxu0 %v997
        %v1195 = vpop.f32.mrf.mxu0
        %v1196 = vadd.f32 %v1107, %v1195
        %v1197 = vpop.f32.mrf.mxu0
        %v1198 = vadd.f32 %v1109, %v1197
        %1199 = vmatmul.bf16.gmra.mxu0 %v999
        %v1200 = vpop.f32.mrf.mxu0
        %v1201 = vadd.f32 %v1112, %v1200
        %v1202 = vpop.f32.mrf.mxu0
        %v1203 = vadd.f32 %v1114, %v1202
        %1204 = vmatmul.bf16.gmra.mxu0 %v1001
        %v1205 = vpop.f32.mrf.mxu0
        %v1206 = vadd.f32 %v1117, %v1205
        %v1207 = vpop.f32.mrf.mxu0
        %v1208 = vadd.f32 %v1119, %v1207
        %1209 = vmatmul.bf16.gmra.mxu0 %v1003
        %v1210 = vpop.f32.mrf.mxu0
        %v1211 = vadd.f32 %v1122, %v1210
        %v1212 = vpop.f32.mrf.mxu0
        %v1213 = vadd.f32 %v1124, %v1212
        %1214 = vmatmul.bf16.gmra.mxu0 %v1005
        %v1215 = vpop.f32.mrf.mxu0
        %v1216 = vadd.f32 %v1127, %v1215
        %v1217 = vpop.f32.mrf.mxu0
        %v1218 = vadd.f32 %v1129, %v1217
        %1219 = vmatmul.bf16.gmra.mxu0 %v1007
        %v1220 = vpop.f32.mrf.mxu0
        %v1221 = vadd.f32 %v1132, %v1220
        %v1222 = vpop.f32.mrf.mxu0
        %v1223 = vadd.f32 %v1134, %v1222
        %1224 = vmatmul.bf16.gmra.mxu0 %v1009
        %v1225 = vpop.f32.mrf.mxu0
        %v1226 = vadd.f32 %v1137, %v1225
        %v1227 = vpop.f32.mrf.mxu0
        %v1228 = vadd.f32 %v1139, %v1227
        %1229 = vmatmul.bf16.gmra.mxu0 %v1011
        %v1230 = vpop.f32.mrf.mxu0
        %v1231 = vadd.f32 %v1142, %v1230
        %v1232 = vpop.f32.mrf.mxu0
        %v1233 = vadd.f32 %v1144, %v1232
        %1234 = vmatmul.bf16.gmra.mxu0 %v1013
        %v1235 = vpop.f32.mrf.mxu0
        %v1236 = vadd.f32 %v1147, %v1235
        %v1237 = vpop.f32.mrf.mxu0
        %v1238 = vadd.f32 %v1149, %v1237
        %1239 = vdwg.mxu0
        %v1240 = vrcp.pop %v888
        %v1241 = vmul.f32 %v888, %v1240
        %v1242 = vsub.f32 1.0, %v1241
        %v1243 = vmul.f32 %v1240, %v1242
        %v1244 = vadd.f32 %v1240, %v1243
        %vm1245 = vweird.f32 %v888
        %vm1246 = vweird.f32 %v1240
        %vm1247 = vmor %vm1245, %vm1246
        %v1248 = vsel %vm1247, %v1240, %v1244
        %v1249 = vand.u32 2147483647, %v888
        %vm1250 = vcmp.eq.f32.partialorder %v1249, 8.507059e+37
        %v1251 = vand.u32 %v888, 2147483648
        %v1252 = vor.u32 1.1754944e-38, %v1251
        %v1253 = vsel %vm1250, %v1252, %v1248
        %v1254 = vmul.f32 %v1161, %v1253
        %v1255 = vrcp.pop %v891
        %v1256 = vmul.f32 %v891, %v1255
        %v1257 = vsub.f32 1.0, %v1256
        %v1258 = vmul.f32 %v1255, %v1257
        %v1259 = vadd.f32 %v1255, %v1258
        %vm1260 = vweird.f32 %v891
        %vm1261 = vweird.f32 %v1255
        %vm1262 = vmor %vm1260, %vm1261
        %v1263 = vsel %vm1262, %v1255, %v1259
        %v1264 = vand.u32 2147483647, %v891
        %vm1265 = vcmp.eq.f32.partialorder %v1264, 8.507059e+37
        %v1266 = vand.u32 %v891, 2147483648
        %v1267 = vor.u32 1.1754944e-38, %v1266
        %v1268 = vsel %vm1265, %v1267, %v1263
        %v1269 = vmul.f32 %v1163, %v1268
        %v1270 = vrcp.pop %v894
        %v1271 = vmul.f32 %v894, %v1270
        %v1272 = vsub.f32 1.0, %v1271
        %v1273 = vmul.f32 %v1270, %v1272
        %v1274 = vadd.f32 %v1270, %v1273
        %vm1275 = vweird.f32 %v894
        %vm1276 = vweird.f32 %v1270
        %vm1277 = vmor %vm1275, %vm1276
        %v1278 = vsel %vm1277, %v1270, %v1274
        %v1279 = vand.u32 2147483647, %v894
        %vm1280 = vcmp.eq.f32.partialorder %v1279, 8.507059e+37
        %v1281 = vand.u32 %v894, 2147483648
        %v1282 = vor.u32 1.1754944e-38, %v1281
        %v1283 = vsel %vm1280, %v1282, %v1278
        %v1284 = vmul.f32 %v1166, %v1283
        %v1285 = vrcp.pop %v897
        %v1286 = vmul.f32 %v897, %v1285
        %v1287 = vsub.f32 1.0, %v1286
        %v1288 = vmul.f32 %v1285, %v1287
        %v1289 = vadd.f32 %v1285, %v1288
        %vm1290 = vweird.f32 %v897
        %vm1291 = vweird.f32 %v1285
        %vm1292 = vmor %vm1290, %vm1291
        %v1293 = vsel %vm1292, %v1285, %v1289
        %v1294 = vand.u32 2147483647, %v897
        %vm1295 = vcmp.eq.f32.partialorder %v1294, 8.507059e+37
        %v1296 = vand.u32 %v897, 2147483648
        %v1297 = vor.u32 1.1754944e-38, %v1296
        %v1298 = vsel %vm1295, %v1297, %v1293
        %v1299 = vmul.f32 %v1168, %v1298
        %v1300 = vrcp.pop %v900
        %v1301 = vmul.f32 %v900, %v1300
        %v1302 = vsub.f32 1.0, %v1301
        %v1303 = vmul.f32 %v1300, %v1302
        %v1304 = vadd.f32 %v1300, %v1303
        %vm1305 = vweird.f32 %v900
        %vm1306 = vweird.f32 %v1300
        %vm1307 = vmor %vm1305, %vm1306
        %v1308 = vsel %vm1307, %v1300, %v1304
        %v1309 = vand.u32 2147483647, %v900
        %vm1310 = vcmp.eq.f32.partialorder %v1309, 8.507059e+37
        %v1311 = vand.u32 %v900, 2147483648
        %v1312 = vor.u32 1.1754944e-38, %v1311
        %v1313 = vsel %vm1310, %v1312, %v1308
        %v1314 = vmul.f32 %v1171, %v1313
        %v1315 = vrcp.pop %v903
        %v1316 = vmul.f32 %v903, %v1315
        %v1317 = vsub.f32 1.0, %v1316
        %v1318 = vmul.f32 %v1315, %v1317
        %v1319 = vadd.f32 %v1315, %v1318
        %vm1320 = vweird.f32 %v903
        %vm1321 = vweird.f32 %v1315
        %vm1322 = vmor %vm1320, %vm1321
        %v1323 = vsel %vm1322, %v1315, %v1319
        %v1324 = vand.u32 2147483647, %v903
        %vm1325 = vcmp.eq.f32.partialorder %v1324, 8.507059e+37
        %v1326 = vand.u32 %v903, 2147483648
        %v1327 = vor.u32 1.1754944e-38, %v1326
        %v1328 = vsel %vm1325, %v1327, %v1323
        %v1329 = vmul.f32 %v1173, %v1328
        %v1330 = vrcp.pop %v906
        %v1331 = vmul.f32 %v906, %v1330
        %v1332 = vsub.f32 1.0, %v1331
        %v1333 = vmul.f32 %v1330, %v1332
        %v1334 = vadd.f32 %v1330, %v1333
        %vm1335 = vweird.f32 %v906
        %vm1336 = vweird.f32 %v1330
        %vm1337 = vmor %vm1335, %vm1336
        %v1338 = vsel %vm1337, %v1330, %v1334
        %v1339 = vand.u32 2147483647, %v906
        %vm1340 = vcmp.eq.f32.partialorder %v1339, 8.507059e+37
        %v1341 = vand.u32 %v906, 2147483648
        %v1342 = vor.u32 1.1754944e-38, %v1341
        %v1343 = vsel %vm1340, %v1342, %v1338
        %v1344 = vmul.f32 %v1176, %v1343
        %v1345 = vrcp.pop %v909
        %v1346 = vmul.f32 %v909, %v1345
        %v1347 = vsub.f32 1.0, %v1346
        %v1348 = vmul.f32 %v1345, %v1347
        %v1349 = vadd.f32 %v1345, %v1348
        %vm1350 = vweird.f32 %v909
        %vm1351 = vweird.f32 %v1345
        %vm1352 = vmor %vm1350, %vm1351
        %v1353 = vsel %vm1352, %v1345, %v1349
        %v1354 = vand.u32 2147483647, %v909
        %vm1355 = vcmp.eq.f32.partialorder %v1354, 8.507059e+37
        %v1356 = vand.u32 %v909, 2147483648
        %v1357 = vor.u32 1.1754944e-38, %v1356
        %v1358 = vsel %vm1355, %v1357, %v1353
        %v1359 = vmul.f32 %v1178, %v1358
        %v1360 = vrcp.pop %v912
        %v1361 = vmul.f32 %v912, %v1360
        %v1362 = vsub.f32 1.0, %v1361
        %v1363 = vmul.f32 %v1360, %v1362
        %v1364 = vadd.f32 %v1360, %v1363
        %vm1365 = vweird.f32 %v912
        %vm1366 = vweird.f32 %v1360
        %vm1367 = vmor %vm1365, %vm1366
        %v1368 = vsel %vm1367, %v1360, %v1364
        %v1369 = vand.u32 2147483647, %v912
        %vm1370 = vcmp.eq.f32.partialorder %v1369, 8.507059e+37
        %v1371 = vand.u32 %v912, 2147483648
        %v1372 = vor.u32 1.1754944e-38, %v1371
        %v1373 = vsel %vm1370, %v1372, %v1368
        %v1374 = vmul.f32 %v1181, %v1373
        %v1375 = vrcp.pop %v915
        %v1376 = vmul.f32 %v915, %v1375
        %v1377 = vsub.f32 1.0, %v1376
        %v1378 = vmul.f32 %v1375, %v1377
        %v1379 = vadd.f32 %v1375, %v1378
        %vm1380 = vweird.f32 %v915
        %vm1381 = vweird.f32 %v1375
        %vm1382 = vmor %vm1380, %vm1381
        %v1383 = vsel %vm1382, %v1375, %v1379
        %v1384 = vand.u32 2147483647, %v915
        %vm1385 = vcmp.eq.f32.partialorder %v1384, 8.507059e+37
        %v1386 = vand.u32 %v915, 2147483648
        %v1387 = vor.u32 1.1754944e-38, %v1386
        %v1388 = vsel %vm1385, %v1387, %v1383
        %v1389 = vmul.f32 %v1183, %v1388
        %v1390 = vrcp.pop %v918
        %v1391 = vmul.f32 %v918, %v1390
        %v1392 = vsub.f32 1.0, %v1391
        %v1393 = vmul.f32 %v1390, %v1392
        %v1394 = vadd.f32 %v1390, %v1393
        %vm1395 = vweird.f32 %v918
        %vm1396 = vweird.f32 %v1390
        %vm1397 = vmor %vm1395, %vm1396
        %v1398 = vsel %vm1397, %v1390, %v1394
        %v1399 = vand.u32 2147483647, %v918
        %vm1400 = vcmp.eq.f32.partialorder %v1399, 8.507059e+37
        %v1401 = vand.u32 %v918, 2147483648
        %v1402 = vor.u32 1.1754944e-38, %v1401
        %v1403 = vsel %vm1400, %v1402, %v1398
        %v1404 = vmul.f32 %v1186, %v1403
        %v1405 = vrcp.pop %v921
        %v1406 = vmul.f32 %v921, %v1405
        %v1407 = vsub.f32 1.0, %v1406
        %v1408 = vmul.f32 %v1405, %v1407
        %v1409 = vadd.f32 %v1405, %v1408
        %vm1410 = vweird.f32 %v921
        %vm1411 = vweird.f32 %v1405
        %vm1412 = vmor %vm1410, %vm1411
        %v1413 = vsel %vm1412, %v1405, %v1409
        %v1414 = vand.u32 2147483647, %v921
        %vm1415 = vcmp.eq.f32.partialorder %v1414, 8.507059e+37
        %v1416 = vand.u32 %v921, 2147483648
        %v1417 = vor.u32 1.1754944e-38, %v1416
        %v1418 = vsel %vm1415, %v1417, %v1413
        %v1419 = vmul.f32 %v1188, %v1418
        %v1420 = vrcp.pop %v924
        %v1421 = vmul.f32 %v924, %v1420
        %v1422 = vsub.f32 1.0, %v1421
        %v1423 = vmul.f32 %v1420, %v1422
        %v1424 = vadd.f32 %v1420, %v1423
        %vm1425 = vweird.f32 %v924
        %vm1426 = vweird.f32 %v1420
        %vm1427 = vmor %vm1425, %vm1426
        %v1428 = vsel %vm1427, %v1420, %v1424
        %v1429 = vand.u32 2147483647, %v924
        %vm1430 = vcmp.eq.f32.partialorder %v1429, 8.507059e+37
        %v1431 = vand.u32 %v924, 2147483648
        %v1432 = vor.u32 1.1754944e-38, %v1431
        %v1433 = vsel %vm1430, %v1432, %v1428
        %v1434 = vmul.f32 %v1191, %v1433
        %v1435 = vrcp.pop %v927
        %v1436 = vmul.f32 %v927, %v1435
        %v1437 = vsub.f32 1.0, %v1436
        %v1438 = vmul.f32 %v1435, %v1437
        %v1439 = vadd.f32 %v1435, %v1438
        %vm1440 = vweird.f32 %v927
        %vm1441 = vweird.f32 %v1435
        %vm1442 = vmor %vm1440, %vm1441
        %v1443 = vsel %vm1442, %v1435, %v1439
        %v1444 = vand.u32 2147483647, %v927
        %vm1445 = vcmp.eq.f32.partialorder %v1444, 8.507059e+37
        %v1446 = vand.u32 %v927, 2147483648
        %v1447 = vor.u32 1.1754944e-38, %v1446
        %v1448 = vsel %vm1445, %v1447, %v1443
        %v1449 = vmul.f32 %v1193, %v1448
        %v1450 = vrcp.pop %v930
        %v1451 = vmul.f32 %v930, %v1450
        %v1452 = vsub.f32 1.0, %v1451
        %v1453 = vmul.f32 %v1450, %v1452
        %v1454 = vadd.f32 %v1450, %v1453
        %vm1455 = vweird.f32 %v930
        %vm1456 = vweird.f32 %v1450
        %vm1457 = vmor %vm1455, %vm1456
        %v1458 = vsel %vm1457, %v1450, %v1454
        %v1459 = vand.u32 2147483647, %v930
        %vm1460 = vcmp.eq.f32.partialorder %v1459, 8.507059e+37
        %v1461 = vand.u32 %v930, 2147483648
        %v1462 = vor.u32 1.1754944e-38, %v1461
        %v1463 = vsel %vm1460, %v1462, %v1458
        %v1464 = vmul.f32 %v1196, %v1463
        %v1465 = vrcp.pop %v933
        %v1466 = vmul.f32 %v933, %v1465
        %v1467 = vsub.f32 1.0, %v1466
        %v1468 = vmul.f32 %v1465, %v1467
        %v1469 = vadd.f32 %v1465, %v1468
        %vm1470 = vweird.f32 %v933
        %vm1471 = vweird.f32 %v1465
        %vm1472 = vmor %vm1470, %vm1471
        %v1473 = vsel %vm1472, %v1465, %v1469
        %v1474 = vand.u32 2147483647, %v933
        %vm1475 = vcmp.eq.f32.partialorder %v1474, 8.507059e+37
        %v1476 = vand.u32 %v933, 2147483648
        %v1477 = vor.u32 1.1754944e-38, %v1476
        %v1478 = vsel %vm1475, %v1477, %v1473
        %v1479 = vmul.f32 %v1198, %v1478
        %v1480 = vrcp.pop %v936
        %v1481 = vmul.f32 %v936, %v1480
        %v1482 = vsub.f32 1.0, %v1481
        %v1483 = vmul.f32 %v1480, %v1482
        %v1484 = vadd.f32 %v1480, %v1483
        %vm1485 = vweird.f32 %v936
        %vm1486 = vweird.f32 %v1480
        %vm1487 = vmor %vm1485, %vm1486
        %v1488 = vsel %vm1487, %v1480, %v1484
        %v1489 = vand.u32 2147483647, %v936
        %vm1490 = vcmp.eq.f32.partialorder %v1489, 8.507059e+37
        %v1491 = vand.u32 %v936, 2147483648
        %v1492 = vor.u32 1.1754944e-38, %v1491
        %v1493 = vsel %vm1490, %v1492, %v1488
        %v1494 = vmul.f32 %v1201, %v1493
        %v1495 = vrcp.pop %v939
        %v1496 = vmul.f32 %v939, %v1495
        %v1497 = vsub.f32 1.0, %v1496
        %v1498 = vmul.f32 %v1495, %v1497
        %v1499 = vadd.f32 %v1495, %v1498
        %vm1500 = vweird.f32 %v939
        %vm1501 = vweird.f32 %v1495
        %vm1502 = vmor %vm1500, %vm1501
        %v1503 = vsel %vm1502, %v1495, %v1499
        %v1504 = vand.u32 2147483647, %v939
        %vm1505 = vcmp.eq.f32.partialorder %v1504, 8.507059e+37
        %v1506 = vand.u32 %v939, 2147483648
        %v1507 = vor.u32 1.1754944e-38, %v1506
        %v1508 = vsel %vm1505, %v1507, %v1503
        %v1509 = vmul.f32 %v1203, %v1508
        %v1510 = vrcp.pop %v942
        %v1511 = vmul.f32 %v942, %v1510
        %v1512 = vsub.f32 1.0, %v1511
        %v1513 = vmul.f32 %v1510, %v1512
        %v1514 = vadd.f32 %v1510, %v1513
        %vm1515 = vweird.f32 %v942
        %vm1516 = vweird.f32 %v1510
        %vm1517 = vmor %vm1515, %vm1516
        %v1518 = vsel %vm1517, %v1510, %v1514
        %v1519 = vand.u32 2147483647, %v942
        %vm1520 = vcmp.eq.f32.partialorder %v1519, 8.507059e+37
        %v1521 = vand.u32 %v942, 2147483648
        %v1522 = vor.u32 1.1754944e-38, %v1521
        %v1523 = vsel %vm1520, %v1522, %v1518
        %v1524 = vmul.f32 %v1206, %v1523
        %v1525 = vrcp.pop %v945
        %v1526 = vmul.f32 %v945, %v1525
        %v1527 = vsub.f32 1.0, %v1526
        %v1528 = vmul.f32 %v1525, %v1527
        %v1529 = vadd.f32 %v1525, %v1528
        %vm1530 = vweird.f32 %v945
        %vm1531 = vweird.f32 %v1525
        %vm1532 = vmor %vm1530, %vm1531
        %v1533 = vsel %vm1532, %v1525, %v1529
        %v1534 = vand.u32 2147483647, %v945
        %vm1535 = vcmp.eq.f32.partialorder %v1534, 8.507059e+37
        %v1536 = vand.u32 %v945, 2147483648
        %v1537 = vor.u32 1.1754944e-38, %v1536
        %v1538 = vsel %vm1535, %v1537, %v1533
        %v1539 = vmul.f32 %v1208, %v1538
        %v1540 = vrcp.pop %v948
        %v1541 = vmul.f32 %v948, %v1540
        %v1542 = vsub.f32 1.0, %v1541
        %v1543 = vmul.f32 %v1540, %v1542
        %v1544 = vadd.f32 %v1540, %v1543
        %vm1545 = vweird.f32 %v948
        %vm1546 = vweird.f32 %v1540
        %vm1547 = vmor %vm1545, %vm1546
        %v1548 = vsel %vm1547, %v1540, %v1544
        %v1549 = vand.u32 2147483647, %v948
        %vm1550 = vcmp.eq.f32.partialorder %v1549, 8.507059e+37
        %v1551 = vand.u32 %v948, 2147483648
        %v1552 = vor.u32 1.1754944e-38, %v1551
        %v1553 = vsel %vm1550, %v1552, %v1548
        %v1554 = vmul.f32 %v1211, %v1553
        %v1555 = vrcp.pop %v951
        %v1556 = vmul.f32 %v951, %v1555
        %v1557 = vsub.f32 1.0, %v1556
        %v1558 = vmul.f32 %v1555, %v1557
        %v1559 = vadd.f32 %v1555, %v1558
        %vm1560 = vweird.f32 %v951
        %vm1561 = vweird.f32 %v1555
        %vm1562 = vmor %vm1560, %vm1561
        %v1563 = vsel %vm1562, %v1555, %v1559
        %v1564 = vand.u32 2147483647, %v951
        %vm1565 = vcmp.eq.f32.partialorder %v1564, 8.507059e+37
        %v1566 = vand.u32 %v951, 2147483648
        %v1567 = vor.u32 1.1754944e-38, %v1566
        %v1568 = vsel %vm1565, %v1567, %v1563
        %v1569 = vmul.f32 %v1213, %v1568
        %v1570 = vrcp.pop %v954
        %v1571 = vmul.f32 %v954, %v1570
        %v1572 = vsub.f32 1.0, %v1571
        %v1573 = vmul.f32 %v1570, %v1572
        %v1574 = vadd.f32 %v1570, %v1573
        %vm1575 = vweird.f32 %v954
        %vm1576 = vweird.f32 %v1570
        %vm1577 = vmor %vm1575, %vm1576
        %v1578 = vsel %vm1577, %v1570, %v1574
        %v1579 = vand.u32 2147483647, %v954
        %vm1580 = vcmp.eq.f32.partialorder %v1579, 8.507059e+37
        %v1581 = vand.u32 %v954, 2147483648
        %v1582 = vor.u32 1.1754944e-38, %v1581
        %v1583 = vsel %vm1580, %v1582, %v1578
        %v1584 = vmul.f32 %v1216, %v1583
        %v1585 = vrcp.pop %v957
        %v1586 = vmul.f32 %v957, %v1585
        %v1587 = vsub.f32 1.0, %v1586
        %v1588 = vmul.f32 %v1585, %v1587
        %v1589 = vadd.f32 %v1585, %v1588
        %vm1590 = vweird.f32 %v957
        %vm1591 = vweird.f32 %v1585
        %vm1592 = vmor %vm1590, %vm1591
        %v1593 = vsel %vm1592, %v1585, %v1589
        %v1594 = vand.u32 2147483647, %v957
        %vm1595 = vcmp.eq.f32.partialorder %v1594, 8.507059e+37
        %v1596 = vand.u32 %v957, 2147483648
        %v1597 = vor.u32 1.1754944e-38, %v1596
        %v1598 = vsel %vm1595, %v1597, %v1593
        %v1599 = vmul.f32 %v1218, %v1598
        %v1600 = vrcp.pop %v960
        %v1601 = vmul.f32 %v960, %v1600
        %v1602 = vsub.f32 1.0, %v1601
        %v1603 = vmul.f32 %v1600, %v1602
        %v1604 = vadd.f32 %v1600, %v1603
        %vm1605 = vweird.f32 %v960
        %vm1606 = vweird.f32 %v1600
        %vm1607 = vmor %vm1605, %vm1606
        %v1608 = vsel %vm1607, %v1600, %v1604
        %v1609 = vand.u32 2147483647, %v960
        %vm1610 = vcmp.eq.f32.partialorder %v1609, 8.507059e+37
        %v1611 = vand.u32 %v960, 2147483648
        %v1612 = vor.u32 1.1754944e-38, %v1611
        %v1613 = vsel %vm1610, %v1612, %v1608
        %v1614 = vmul.f32 %v1221, %v1613
        %v1615 = vrcp.pop %v963
        %v1616 = vmul.f32 %v963, %v1615
        %v1617 = vsub.f32 1.0, %v1616
        %v1618 = vmul.f32 %v1615, %v1617
        %v1619 = vadd.f32 %v1615, %v1618
        %vm1620 = vweird.f32 %v963
        %vm1621 = vweird.f32 %v1615
        %vm1622 = vmor %vm1620, %vm1621
        %v1623 = vsel %vm1622, %v1615, %v1619
        %v1624 = vand.u32 2147483647, %v963
        %vm1625 = vcmp.eq.f32.partialorder %v1624, 8.507059e+37
        %v1626 = vand.u32 %v963, 2147483648
        %v1627 = vor.u32 1.1754944e-38, %v1626
        %v1628 = vsel %vm1625, %v1627, %v1623
        %v1629 = vmul.f32 %v1223, %v1628
        %v1630 = vrcp.pop %v966
        %v1631 = vmul.f32 %v966, %v1630
        %v1632 = vsub.f32 1.0, %v1631
        %v1633 = vmul.f32 %v1630, %v1632
        %v1634 = vadd.f32 %v1630, %v1633
        %vm1635 = vweird.f32 %v966
        %vm1636 = vweird.f32 %v1630
        %vm1637 = vmor %vm1635, %vm1636
        %v1638 = vsel %vm1637, %v1630, %v1634
        %v1639 = vand.u32 2147483647, %v966
        %vm1640 = vcmp.eq.f32.partialorder %v1639, 8.507059e+37
        %v1641 = vand.u32 %v966, 2147483648
        %v1642 = vor.u32 1.1754944e-38, %v1641
        %v1643 = vsel %vm1640, %v1642, %v1638
        %v1644 = vmul.f32 %v1226, %v1643
        %v1645 = vrcp.pop %v969
        %v1646 = vmul.f32 %v969, %v1645
        %v1647 = vsub.f32 1.0, %v1646
        %v1648 = vmul.f32 %v1645, %v1647
        %v1649 = vadd.f32 %v1645, %v1648
        %vm1650 = vweird.f32 %v969
        %vm1651 = vweird.f32 %v1645
        %vm1652 = vmor %vm1650, %vm1651
        %v1653 = vsel %vm1652, %v1645, %v1649
        %v1654 = vand.u32 2147483647, %v969
        %vm1655 = vcmp.eq.f32.partialorder %v1654, 8.507059e+37
        %v1656 = vand.u32 %v969, 2147483648
        %v1657 = vor.u32 1.1754944e-38, %v1656
        %v1658 = vsel %vm1655, %v1657, %v1653
        %v1659 = vmul.f32 %v1228, %v1658
        %v1660 = vrcp.pop %v972
        %v1661 = vmul.f32 %v972, %v1660
        %v1662 = vsub.f32 1.0, %v1661
        %v1663 = vmul.f32 %v1660, %v1662
        %v1664 = vadd.f32 %v1660, %v1663
        %vm1665 = vweird.f32 %v972
        %vm1666 = vweird.f32 %v1660
        %vm1667 = vmor %vm1665, %vm1666
        %v1668 = vsel %vm1667, %v1660, %v1664
        %v1669 = vand.u32 2147483647, %v972
        %vm1670 = vcmp.eq.f32.partialorder %v1669, 8.507059e+37
        %v1671 = vand.u32 %v972, 2147483648
        %v1672 = vor.u32 1.1754944e-38, %v1671
        %v1673 = vsel %vm1670, %v1672, %v1668
        %v1674 = vmul.f32 %v1231, %v1673
        %v1675 = vrcp.pop %v975
        %v1676 = vmul.f32 %v975, %v1675
        %v1677 = vsub.f32 1.0, %v1676
        %v1678 = vmul.f32 %v1675, %v1677
        %v1679 = vadd.f32 %v1675, %v1678
        %vm1680 = vweird.f32 %v975
        %vm1681 = vweird.f32 %v1675
        %vm1682 = vmor %vm1680, %vm1681
        %v1683 = vsel %vm1682, %v1675, %v1679
        %v1684 = vand.u32 2147483647, %v975
        %vm1685 = vcmp.eq.f32.partialorder %v1684, 8.507059e+37
        %v1686 = vand.u32 %v975, 2147483648
        %v1687 = vor.u32 1.1754944e-38, %v1686
        %v1688 = vsel %vm1685, %v1687, %v1683
        %v1689 = vmul.f32 %v1233, %v1688
        %v1690 = vrcp.pop %v978
        %v1691 = vmul.f32 %v978, %v1690
        %v1692 = vsub.f32 1.0, %v1691
        %v1693 = vmul.f32 %v1690, %v1692
        %v1694 = vadd.f32 %v1690, %v1693
        %vm1695 = vweird.f32 %v978
        %vm1696 = vweird.f32 %v1690
        %vm1697 = vmor %vm1695, %vm1696
        %v1698 = vsel %vm1697, %v1690, %v1694
        %v1699 = vand.u32 2147483647, %v978
        %vm1700 = vcmp.eq.f32.partialorder %v1699, 8.507059e+37
        %v1701 = vand.u32 %v978, 2147483648
        %v1702 = vor.u32 1.1754944e-38, %v1701
        %v1703 = vsel %vm1700, %v1702, %v1698
        %v1704 = vmul.f32 %v1236, %v1703
        %v1705 = vrcp.pop %v981
        %v1706 = vmul.f32 %v981, %v1705
        %v1707 = vsub.f32 1.0, %v1706
        %v1708 = vmul.f32 %v1705, %v1707
        %v1709 = vadd.f32 %v1705, %v1708
        %vm1710 = vweird.f32 %v981
        %vm1711 = vweird.f32 %v1705
        %vm1712 = vmor %vm1710, %vm1711
        %v1713 = vsel %vm1712, %v1705, %v1709
        %v1714 = vand.u32 2147483647, %v981
        %vm1715 = vcmp.eq.f32.partialorder %v1714, 8.507059e+37
        %v1716 = vand.u32 %v981, 2147483648
        %v1717 = vor.u32 1.1754944e-38, %v1716
        %v1718 = vsel %vm1715, %v1717, %v1713
        %v1719 = vmul.f32 %v1238, %v1718
        %1720 = vst [vmem:[%s289] sm:$0xff] %v1254
        %1721 = vst [vmem:[%s289 + $0x8] sm:$0xff] %v1269
        %1722 = vst [vmem:[%s289 + $0x10] sm:$0xff] %v1284
        %1723 = vst [vmem:[%s289 + $0x18] sm:$0xff] %v1299
        %1724 = vst [vmem:[%s289 + $0x20] sm:$0xff] %v1314
        %1725 = vst [vmem:[%s289 + $0x28] sm:$0xff] %v1329
        %1726 = vst [vmem:[%s289 + $0x30] sm:$0xff] %v1344
        %1727 = vst [vmem:[%s289 + $0x38] sm:$0xff] %v1359
        %1728 = vst [vmem:[%s289 + $0x40] sm:$0xff] %v1374
        %1729 = vst [vmem:[%s289 + $0x48] sm:$0xff] %v1389
        %1730 = vst [vmem:[%s289 + $0x50] sm:$0xff] %v1404
        %1731 = vst [vmem:[%s289 + $0x58] sm:$0xff] %v1419
        %1732 = vst [vmem:[%s289 + $0x60] sm:$0xff] %v1434
        %1733 = vst [vmem:[%s289 + $0x68] sm:$0xff] %v1449
        %1734 = vst [vmem:[%s289 + $0x70] sm:$0xff] %v1464
        %1735 = vst [vmem:[%s289 + $0x78] sm:$0xff] %v1479
        %1736 = vst [vmem:[%s289 + $0x80] sm:$0xff] %v1494
        %1737 = vst [vmem:[%s289 + $0x88] sm:$0xff] %v1509
        %1738 = vst [vmem:[%s289 + $0x90] sm:$0xff] %v1524
        %1739 = vst [vmem:[%s289 + $0x98] sm:$0xff] %v1539
        %1740 = vst [vmem:[%s289 + $0xa0] sm:$0xff] %v1554
        %1741 = vst [vmem:[%s289 + $0xa8] sm:$0xff] %v1569
        %1742 = vst [vmem:[%s289 + $0xb0] sm:$0xff] %v1584
        %1743 = vst [vmem:[%s289 + $0xb8] sm:$0xff] %v1599
        %1744 = vst [vmem:[%s289 + $0xc0] sm:$0xff] %v1614
        %1745 = vst [vmem:[%s289 + $0xc8] sm:$0xff] %v1629
        %1746 = vst [vmem:[%s289 + $0xd0] sm:$0xff] %v1644
        %1747 = vst [vmem:[%s289 + $0xd8] sm:$0xff] %v1659
        %1748 = vst [vmem:[%s289 + $0xe0] sm:$0xff] %v1674
        %1749 = vst [vmem:[%s289 + $0xe8] sm:$0xff] %v1689
        %1750 = vst [vmem:[%s289 + $0xf0] sm:$0xff] %v1704
        %1751 = vst [vmem:[%s289 + $0xf8] sm:$0xff] %v1719
        %s1752 = sand.u32 %s125, 1
        %s1753 = scalar_lea.sflag [#allocation4], %s1752
        %s1754 = sand.u32 %s125, 1
        %s1755 = smul.addr %s1754, 256
        %s1756 = scalar_lea.vmem [#allocation8], %s1755
        // Predicated region
        $region45: #{tpu_custom_call.1} parent=31 // pred_check
          %p1757 = pneg %p135
        $region46: #{tpu_custom_call.1} parent=31 // pred_check_branch
          %1759 = sbr.rel (%p1757) target = $region48
        $region47: #{tpu_custom_call.1} parent=31 // pred_region
          %s1760 = smul.u32 32, %s28
          %1762 = vsyncadd %s1753, 0
          %s1763 = smul.addr %s27, 32
          %s1764 = sadd.s32 %s1760, %s1763
          %s1765 = smul.addr %s1764, 8
          %s1766 = scalar_lea.hbm %s3, %s1765
          %s1767 = sshll.u32 %s1756, 4
          %s1768 = int_to_ptr.vmem [resolvable:$true] %s1767
          %s1769 = sshll.u32 %s1766, 4
          %s1770 = int_to_ptr.hbm [resolvable:$true] %s1769
          %1775 = dma.vmem_to_hbm [thread:$0]  %s1768, 4096, %s1770, %s1753, 128, 128, 8
        $region48: #{tpu_custom_call.1} parent=31 // pred_fallthru
          _
      $region32: #{tpu_custom_call.1} parent=5 // pred_fallthru
        _
      %p1776 = scmp.le.s32.totalorder 2, %s18
      // Predicated region
      $region49: #{tpu_custom_call.1} parent=5 // pred_check
        %p1777 = pneg %p1776
      $region50: #{tpu_custom_call.1} parent=5 // pred_check_branch
        %1779 = sbr.rel (%p1777) target = $region52
      $region51: #{tpu_custom_call.1} parent=5 // pred_region
        %s1780 = ssub.s32 %s18, 2
        // Predicated region
        $region53: #{tpu_custom_call.1} parent=51 // pred_check
          %p1781 = pneg %p141
        $region54: #{tpu_custom_call.1} parent=51 // pred_check_branch
          %1783 = sbr.rel (%p1781) target = $region56
        $region55: #{tpu_custom_call.1} parent=51 // pred_region
          %s1784 = sand.u32 %s126, 1
          %s1785 = scalar_lea.sflag [#allocation4], %s1784
          %s1786 = sand.u32 %s126, 1
          %s1787 = smul.addr %s1786, 256
          %s1788 = scalar_lea.vmem [#allocation8], %s1787
          %1790 = dma.done %s1785, 4096
        $region56: #{tpu_custom_call.1} parent=51 // pred_fallthru
          _
      $region52: #{tpu_custom_call.1} parent=5 // pred_fallthru
        _
    $region6: #{tpu_custom_call.1} parent=1 // loop_footer
      %s22 = sadd.s32 1, %s18
    $region7: #{tpu_custom_call.1} parent=1 // loop_footer_branch
      %17 = sbr.rel target = $region3
    $region8: #{tpu_custom_call.1} parent=1 // loop_exit
      _
    %1791 = vsyncpa [#allocation3], 1
    %s1792 = scalar_lea.sflag [#allocation3], 1
    %1793 = vsyncpa %s1792, 1
    %1794 = vsyncpa [#allocation6], 1
    %s1795 = scalar_lea.sflag [#allocation6], 1
    %1796 = vsyncpa %s1795, 1
    %1797 = vsyncpa [#allocation4], 1
    %s1798 = scalar_lea.sflag [#allocation4], 1
    %1799 = vsyncpa %s1798, 1

</llo_original>
